<compile_context>
chip_gen: v7x
topology: tpu7x:2x2x1
jax: 0.10.0
libtpu: 0.0.40
codegen_flags: <defaults>
</compile_context>

<pallas_src>
import jax
import jax.numpy as jnp
import numpy as np
from jax import lax
from jax.experimental import pallas as pl
from jax.experimental.pallas import tpu as pltpu


# ---------------------------------------------------------------------------
# trace-time tile choosers (always produce (8,128)-legal, unmasked blocks)
# ---------------------------------------------------------------------------
def _choose_row_tile(H, W, Cin, C4, target_bytes=2 << 20):
    """Input-row tile for kernel 1: divides H and tile*W is a multiple of 128
    (lane-dense output blocks); falls back to full-height tiles (always legal)."""
    per_row = 4 * ((W + 1) * Cin + W * C4)
    cands = [d for d in range(1, H + 1) if H % d == 0 and (d * W) % 128 == 0]
    if not cands:
        return H
    fit = [d for d in cands if d * per_row <= target_bytes]
    return max(fit) if fit else min(cands)


def _choose_pixel_tile(M, C4, target_bytes=4 << 20):
    """Pixel tile for kernel 2: divides M and is a multiple of 128 (else full M)."""
    per_col = 8 * C4  # f32 in + out
    cands = [d for d in range(1, M + 1) if M % d == 0 and d % 128 == 0]
    if not cands:
        return M
    fit = [d for d in cands if d * per_col <= target_bytes]
    return max(fit) if fit else min(cands)


# ---------------------------------------------------------------------------
# Kernel 1: 4-phase ConvTranspose2d(k=3,s=2,p=1,op=1) as one fused matmul
#           + per-tile BN partial sums; output stored channel-phase-major.
# ---------------------------------------------------------------------------
def _make_deconv_kernel(th, W, Cin, C4):
    def kernel(xa_ref, xh_ref, w_ref, b_ref, y_ref, ssum_ref, ssq_ref):
        # xa_ref: (1, th, W+1, Cin)   row tile of padded NHWC input
        # xh_ref: (1, 1,  W+1, Cin)   one-row halo (row  tile_end )
        # w_ref : (4Cin, 4Cout)       block weight matrix, cols = phases (a,b,c)
        # b_ref : (1, 4Cout)          conv bias tiled across phases
        # y_ref : (1, 4Cout, th*W)    conv output, channel-phase-major (lane-dense)
        # ssum/ssq_ref: (1,1,1,4Cout) per-tile column sum / sum-of-squares
        xa = xa_ref[0]                                   # (th, W+1, Cin)   rows i
        xh = xh_ref[0]                                   # (1,  W+1, Cin)
        x_nxt = jnp.concatenate([xa[1:], xh], axis=0)    # (th, W+1, Cin)   rows i+1
        # shifted-tap stack: [x(i,j) | x(i,j+1) | x(i+1,j) | x(i+1,j+1)]
        x4 = jnp.concatenate(
            [xa[:, :W, :], xa[:, 1:, :], x_nxt[:, :W, :], x_nxt[:, 1:, :]],
            axis=-1)                                     # (th, W, 4Cin)
        lhs = x4.reshape(th * W, 4 * Cin)
        yc = jnp.dot(lhs, w_ref[...], preferred_element_type=jnp.float32)
        # BN partial sums on the pre-bias result (bias folded into the mean later)
        ssum_ref[...] = jnp.sum(yc, axis=0, keepdims=True).reshape(1, 1, 1, C4)
        ssq_ref[...] = jnp.sum(yc * yc, axis=0, keepdims=True).reshape(1, 1, 1, C4)
        y = yc + b_ref[...]                              # (th*W, 4Cout)
        # store transposed: lane dim = pixels (>=128 multiple) -> unmasked stores
        y_ref[0] = y.T.astype(y_ref.dtype)

    return kernel


def deconv_bn_stats_pallas(xp, w_big, bias_row, *, H, W, Cin, Cout, th):
    N = xp.shape[0]
    C4 = 4 * Cout
    n_t = H // th
    M = H * W
    tm = th * W

    kernel = _make_deconv_kernel(th, W, Cin, C4)
    return pl.pallas_call(
        kernel,
        out_shape=(
            jax.ShapeDtypeStruct((N, C4, M), jnp.float32),
            jax.ShapeDtypeStruct((N, n_t, 1, C4), jnp.float32),
            jax.ShapeDtypeStruct((N, n_t, 1, C4), jnp.float32),
        ),
        grid_spec=pltpu.PrefetchScalarGridSpec(
            num_scalar_prefetch=0,
            grid=(N, n_t),
            in_specs=[
                pl.BlockSpec((1, th, W + 1, Cin), lambda n, t: (n, t, 0, 0)),
                pl.BlockSpec((1, 1, W + 1, Cin),
                             lambda n, t: (n, (t + 1) * th, 0, 0)),
                pl.BlockSpec((4 * Cin, C4), lambda n, t: (0, 0)),
                pl.BlockSpec((1, C4), lambda n, t: (0, 0)),
            ],
            out_specs=[
                pl.BlockSpec((1, C4, tm), lambda n, t: (n, 0, t)),
                pl.BlockSpec((1, 1, 1, C4), lambda n, t: (n, t, 0, 0)),
                pl.BlockSpec((1, 1, 1, C4), lambda n, t: (n, t, 0, 0)),
            ],
        ),
        compiler_params=pltpu.CompilerParams(
            dimension_semantics=("parallel", "parallel"),
            vmem_limit_bytes=48 * 1024 * 1024),
    )(xp, xp, w_big, bias_row)


# ---------------------------------------------------------------------------
# Kernel 2: tiled, lane-dense  y*scale + shift  ->  ReLU
# (scale/shift fold gamma, beta, batch mean/inv-std and the conv bias per channel)
# ---------------------------------------------------------------------------
def _bn_relu_kernel(y_ref, sc_ref, sh_ref, o_ref):
    o_ref[0] = jnp.maximum(y_ref[0] * sc_ref[...] + sh_ref[...], 0.0)


def bn_relu_pallas(y1, scale_col, shift_col, *, tm):
    N, C4, M = y1.shape
    n_t = M // tm
    return pl.pallas_call(
        _bn_relu_kernel,
        out_shape=jax.ShapeDtypeStruct((N, C4, M), jnp.float32),
        grid_spec=pltpu.PrefetchScalarGridSpec(
            num_scalar_prefetch=0,
            grid=(N, n_t),
            in_specs=[
                pl.BlockSpec((1, C4, tm), lambda n, t: (n, 0, t)),
                pl.BlockSpec((C4, 1), lambda n, t: (0, 0)),
                pl.BlockSpec((C4, 1), lambda n, t: (0, 0)),
            ],
            out_specs=pl.BlockSpec((1, C4, tm), lambda n, t: (n, 0, t)),
        ),
        compiler_params=pltpu.CompilerParams(
            dimension_semantics=("parallel", "parallel"),
            vmem_limit_bytes=48 * 1024 * 1024),
    )(y1, scale_col, shift_col)


# ---------------------------------------------------------------------------
# Full UpsamplerBlock forward (NCHW in / NCHW out, like PyTorch)
# ---------------------------------------------------------------------------
def upsampler_block_forward(x_nchw, w_pt, bias, gamma, beta, eps=1e-3):
    # w_pt: PyTorch ConvTranspose2d weight layout (Cin, Cout, kH, kW)
    N, Cin, H, W = x_nchw.shape
    Cout = w_pt.shape[1]
    C4 = 4 * Cout

    # ---- layout prep (one cheap XLA pad+transpose over the input only) ------
    x_nhwc = jnp.transpose(x_nchw, (0, 2, 3, 1)).astype(jnp.float32)
    xp = jnp.pad(x_nhwc, ((0, 0), (0, 1), (0, 1), (0, 0)))   # (N, H+1, W+1, Cin)

    # block weight matrix: rows = taps [x(i,j)|x(i,j+1)|x(i+1,j)|x(i+1,j+1)],
    # cols = output phases (a,b) = [(0,0)|(0,1)|(1,0)|(1,1)], each (Cin, Cout).
    # ConvTranspose relation: out[2i+a, 2j+b] += x[iy, ix] * W[ky, kx] with
    # ky = 2(i-iy)+a+1, kx = 2(j-ix)+b+1.
    w = jnp.transpose(w_pt, (2, 3, 0, 1)).astype(jnp.float32)  # (kH, kW, Cin, Cout)
    Z = jnp.zeros((Cin, Cout), jnp.float32)
    w_big = jnp.concatenate([
        jnp.concatenate([w[1, 1], w[1, 2], w[2, 1], w[2, 2]], axis=1),  # x[i,   j  ]
        jnp.concatenate([Z,       w[1, 0], Z,       w[2, 0]], axis=1),  # x[i,   j+1]
        jnp.concatenate([Z,       Z,       w[0, 1], w[0, 2]], axis=1),  # x[i+1, j  ]
        jnp.concatenate([Z,       Z,       Z,       w[0, 0]], axis=1),  # x[i+1, j+1]
    ], axis=0)                                                          # (4Cin, 4Cout)
    bias_row = jnp.tile(bias, 4).reshape(1, C4).astype(jnp.float32)

    th = _choose_row_tile(H, W, Cin, C4)

    # ---- kernel 1: transposed conv (channel-phase-major) + BN partial sums --
    y1, ssum, ssq = deconv_bn_stats_pallas(
        xp, w_big, bias_row, H=H, W=W, Cin=Cin, Cout=Cout, th=th)

    # ---- tiny cross-tile / cross-phase stats reduction (scalars, plain JAX) -
    count = jnp.float32(N * H * W * 4)                   # elements per channel
    sum_c = jnp.sum(jnp.sum(ssum, axis=(0, 1, 2)).reshape(4, Cout), axis=0)
    ssq_c = jnp.sum(jnp.sum(ssq, axis=(0, 1, 2)).reshape(4, Cout), axis=0)
    mean_c = sum_c / count                               # mean of pre-bias conv out
    var_c = jnp.maximum(ssq_c / count - mean_c * mean_c, 0.0)  # biased batch var
    scale = gamma * lax.rsqrt(var_c + eps)
    shift = beta - (mean_c + bias) * scale               # y1 already carries the bias
    scale_col = jnp.tile(scale, 4).reshape(C4, 1)
    shift_col = jnp.tile(shift, 4).reshape(C4, 1)

    # ---- kernel 2: tiled, lane-dense normalize + ReLU ------------------------
    tm2 = _choose_pixel_tile(H * W, C4)
    y2 = bn_relu_pallas(y1, scale_col, shift_col, tm=tm2)

    # ---- single fused phase-interleave + NCHW transpose (XLA) ----------------
    # TODO(synk): in-kernel folding of this interleave needs a fine-grained
    # (row,phase)/(col,phase) relayout with no cheap Mosaic primitive.
    y = y2.reshape(N, 2, 2, Cout, H, W)                  # (n, a, b, c, i, j)
    y = jnp.transpose(y, (0, 3, 4, 1, 5, 2))             # (n, c, i, a, j, b)
    return y.reshape(N, Cout, 2 * H, 2 * W)              # out[n, c, 2i+a, 2j+b]


# ---------------------------------------------------------------------------
# Pure-JAX reference (for correctness check)
# ---------------------------------------------------------------------------
def reference_forward(x_nchw, w_pt, bias, gamma, beta):
    # ConvTranspose2d == dilated-input correlation with spatially-flipped kernel
    wf = jnp.flip(jnp.transpose(w_pt, (1, 0, 2, 3)), axis=(2, 3))  # OIHW, flipped
    conv = lax.conv_general_dilated(
        x_nchw, wf, window_strides=(1, 1),
        padding=((1, 2), (1, 2)),          # (k-1-p, k-1-p+output_padding)
        lhs_dilation=(2, 2), rhs_dilation=(1, 1),
        dimension_numbers=("NCHW", "OIHW", "NCHW"))
    conv = conv + bias.reshape(1, -1, 1, 1)
    mean = jnp.mean(conv, axis=(0, 2, 3), keepdims=True)
    var = jnp.mean((conv - mean) ** 2, axis=(0, 2, 3), keepdims=True)
    y = (conv - mean) * lax.rsqrt(var + 1e-3)
    y = y * gamma.reshape(1, -1, 1, 1) + beta.reshape(1, -1, 1, 1)
    return jnp.maximum(y, 0.0)


if __name__ == "__main__":
    N, Cin, Cout, H, W = 2, 4, 8, 16, 16

    key = jax.random.PRNGKey(0)
    k_x, k_w, k_b, k_g, k_bt = jax.random.split(key, 5)

    x = jax.random.normal(k_x, (N, Cin, H, W), dtype=jnp.float32)
    # ConvTranspose2d weight shape in PyTorch: (Cin, Cout, kH, kW)
    w_pt = 0.3 * jax.random.normal(k_w, (Cin, Cout, 3, 3), dtype=jnp.float32)
    bias = 0.1 * jax.random.normal(k_b, (Cout,), dtype=jnp.float32)
    gamma = 1.0 + 0.1 * jax.random.normal(k_g, (Cout,), dtype=jnp.float32)
    beta = 0.1 * jax.random.normal(k_bt, (Cout,), dtype=jnp.float32)

    fwd = jax.jit(upsampler_block_forward)
    out = jax.block_until_ready(fwd(x, w_pt, bias, gamma, beta))

    ref = jax.block_until_ready(reference_forward(x, w_pt, bias, gamma, beta))

    assert out.shape == (N, Cout, 2 * H, 2 * W), out.shape
    np.testing.assert_allclose(np.asarray(out), np.asarray(ref), rtol=1e-4, atol=1e-4)

    print("KERNEL_OK")
</pallas_src>

<mosaic_0001>
module attributes {stable_mosaic.version = 11 : i64} {
  func.func @kernel(%arg0: i32, %arg1: i32, %arg2: memref<1x16x17x4xf32, #tpu.memory_space<vmem>>, %arg3: memref<1x1x17x4xf32, #tpu.memory_space<vmem>>, %arg4: memref<16x32xf32, #tpu.memory_space<vmem>>, %arg5: memref<1x32xf32, #tpu.memory_space<vmem>>, %arg6: memref<1x32x256xf32, #tpu.memory_space<vmem>>, %arg7: memref<1x1x1x32xf32, #tpu.memory_space<vmem>>, %arg8: memref<1x1x1x32xf32, #tpu.memory_space<vmem>>) attributes {dimension_semantics = [#tpu.dimension_semantics<parallel>, #tpu.dimension_semantics<parallel>], iteration_bounds = array<i64: 2, 1>, scalar_prefetch = 0 : i64, scratch_operands = 0 : i64, tpu.core_type = #tpu.core_type<tc>, window_params = [{transform_indices = @transform_0, window_bounds = array<i64: 1, 16, 17, 4>}, {transform_indices = @transform_1, window_bounds = array<i64: 1, 1, 17, 4>}, {pipeline_mode = #tpu.pipeline_mode<synchronous>, transform_indices = @transform_2, window_bounds = array<i64: 16, 32>}, {pipeline_mode = #tpu.pipeline_mode<synchronous>, transform_indices = @transform_3, window_bounds = array<i64: 1, 32>}, {transform_indices = @transform_4, window_bounds = array<i64: 1, 32, 256>}, {transform_indices = @transform_5, window_bounds = array<i64: 1, 1, 1, 32>}, {transform_indices = @transform_6, window_bounds = array<i64: 1, 1, 1, 32>}]} {
    %c0 = arith.constant 0 : index
    %c0_0 = arith.constant 0 : index
    %c0_1 = arith.constant 0 : index
    %c0_2 = arith.constant 0 : index
    %0 = vector.load %arg2[%c0, %c0_0, %c0_1, %c0_2] : memref<1x16x17x4xf32, #tpu.memory_space<vmem>>, vector<1x16x17x4xf32>
    %1 = vector.shape_cast %0 : vector<1x16x17x4xf32> to vector<16x17x4xf32>
    %c0_3 = arith.constant 0 : index
    %c0_4 = arith.constant 0 : index
    %c0_5 = arith.constant 0 : index
    %c0_6 = arith.constant 0 : index
    %2 = vector.load %arg3[%c0_3, %c0_4, %c0_5, %c0_6] : memref<1x1x17x4xf32, #tpu.memory_space<vmem>>, vector<1x1x17x4xf32>
    %3 = vector.shape_cast %2 : vector<1x1x17x4xf32> to vector<1x17x4xf32>
    %4 = vector.extract_strided_slice %1 {offsets = [1, 0, 0], sizes = [15, 17, 4], strides = [1, 1, 1]} : vector<16x17x4xf32> to vector<15x17x4xf32>
    %5 = tpu.concatenate %4, %3 in 0 : vector<15x17x4xf32>, vector<1x17x4xf32> -> vector<16x17x4xf32>
    %6 = vector.extract_strided_slice %1 {offsets = [0, 0, 0], sizes = [16, 16, 4], strides = [1, 1, 1]} : vector<16x17x4xf32> to vector<16x16x4xf32>
    %7 = vector.extract_strided_slice %1 {offsets = [0, 1, 0], sizes = [16, 16, 4], strides = [1, 1, 1]} : vector<16x17x4xf32> to vector<16x16x4xf32>
    %8 = vector.extract_strided_slice %5 {offsets = [0, 0, 0], sizes = [16, 16, 4], strides = [1, 1, 1]} : vector<16x17x4xf32> to vector<16x16x4xf32>
    %9 = vector.extract_strided_slice %5 {offsets = [0, 1, 0], sizes = [16, 16, 4], strides = [1, 1, 1]} : vector<16x17x4xf32> to vector<16x16x4xf32>
    %10 = tpu.concatenate %6, %7, %8, %9 in 2 : vector<16x16x4xf32>, vector<16x16x4xf32>, vector<16x16x4xf32>, vector<16x16x4xf32> -> vector<16x16x16xf32>
    %11 = vector.shape_cast %10 : vector<16x16x16xf32> to vector<256x16xf32>
    %c0_7 = arith.constant 0 : index
    %c0_8 = arith.constant 0 : index
    %12 = vector.load %arg4[%c0_7, %c0_8] : memref<16x32xf32, #tpu.memory_space<vmem>>, vector<16x32xf32>
    %cst = arith.constant dense<0.000000e+00> : vector<256x32xf32>
    %13 = tpu.matmul %11, %12, %cst {dimension_numbers = #tpu.dot_dimension_numbers<[1], [0], [0], [1], [0, 0, 1, 1], [], []>} : vector<256x16xf32>, vector<16x32xf32>, vector<256x32xf32> -> vector<256x32xf32>
    %cst_9 = arith.constant dense<0.000000e+00> : vector<32xf32>
    %14 = vector.multi_reduction <add>, %13, %cst_9 [0] : vector<256x32xf32> to vector<32xf32>
    %15 = vector.shape_cast %14 : vector<32xf32> to vector<1x32xf32>
    %16 = vector.shape_cast %15 : vector<1x32xf32> to vector<1x1x1x32xf32>
    %c0_10 = arith.constant 0 : index
    %c0_11 = arith.constant 0 : index
    %c0_12 = arith.constant 0 : index
    %c0_13 = arith.constant 0 : index
    %17 = vector.load %arg7[%c0_10, %c0_11, %c0_12, %c0_13] : memref<1x1x1x32xf32, #tpu.memory_space<vmem>>, vector<1x1x1x32xf32>
    tpu.vector_store %arg7[%c0_10, %c0_11, %c0_12, %c0_13], %16 {strides = array<i32>} : memref<1x1x1x32xf32, #tpu.memory_space<vmem>>, vector<1x1x1x32xf32>,
    %18 = arith.mulf %13, %13 : vector<256x32xf32>
    %cst_14 = arith.constant dense<0.000000e+00> : vector<32xf32>
    %19 = vector.multi_reduction <add>, %18, %cst_14 [0] : vector<256x32xf32> to vector<32xf32>
    %20 = vector.shape_cast %19 : vector<32xf32> to vector<1x32xf32>
    %21 = vector.shape_cast %20 : vector<1x32xf32> to vector<1x1x1x32xf32>
    %c0_15 = arith.constant 0 : index
    %c0_16 = arith.constant 0 : index
    %c0_17 = arith.constant 0 : index
    %c0_18 = arith.constant 0 : index
    %22 = vector.load %arg8[%c0_15, %c0_16, %c0_17, %c0_18] : memref<1x1x1x32xf32, #tpu.memory_space<vmem>>, vector<1x1x1x32xf32>
    tpu.vector_store %arg8[%c0_15, %c0_16, %c0_17, %c0_18], %21 {strides = array<i32>} : memref<1x1x1x32xf32, #tpu.memory_space<vmem>>, vector<1x1x1x32xf32>,
    %c0_19 = arith.constant 0 : index
    %c0_20 = arith.constant 0 : index
    %23 = vector.load %arg5[%c0_19, %c0_20] : memref<1x32xf32, #tpu.memory_space<vmem>>, vector<1x32xf32>
    %24 = vector.broadcast %23 : vector<1x32xf32> to vector<256x32xf32>
    %25 = arith.addf %13, %24 : vector<256x32xf32>
    %26 = tpu.transpose %25, [1, 0] : vector<256x32xf32> -> vector<32x256xf32>
    %c0_21 = arith.constant 0 : index
    %c0_22 = arith.constant 0 : index
    %c0_23 = arith.constant 0 : index
    %27 = vector.load %arg6[%c0_21, %c0_22, %c0_23] : memref<1x32x256xf32, #tpu.memory_space<vmem>>, vector<1x32x256xf32>
    %28 = vector.shape_cast %27 : vector<1x32x256xf32> to vector<32x256xf32>
    %29 = vector.shape_cast %26 : vector<32x256xf32> to vector<1x32x256xf32>
    tpu.vector_store %arg6[%c0_21, %c0_22, %c0_23], %29 {strides = array<i32>} : memref<1x32x256xf32, #tpu.memory_space<vmem>>, vector<1x32x256xf32>,
    return
  }
  func.func @transform_0(%arg0: i32, %arg1: i32) -> (i32, i32, i32, i32) {
    %c0_i32 = arith.constant 0 : i32
    %c0_i32_0 = arith.constant 0 : i32
    %c0_i32_1 = arith.constant 0 : i32
    return %arg0, %arg1, %c0_i32, %c0_i32_0 : i32, i32, i32, i32
  }
  func.func @transform_1(%arg0: i32, %arg1: i32) -> (i32, i32, i32, i32) {
    %c1_i32 = arith.constant 1 : i32
    %0 = arith.addi %arg1, %c1_i32 : i32
    %c16_i32 = arith.constant 16 : i32
    %1 = arith.muli %0, %c16_i32 : i32
    %c0_i32 = arith.constant 0 : i32
    %c0_i32_0 = arith.constant 0 : i32
    %c0_i32_1 = arith.constant 0 : i32
    return %arg0, %1, %c0_i32, %c0_i32_0 : i32, i32, i32, i32
  }
  func.func @transform_2(%arg0: i32, %arg1: i32) -> (i32, i32) {
    %c0_i32 = arith.constant 0 : i32
    %c0_i32_0 = arith.constant 0 : i32
    %c0_i32_1 = arith.constant 0 : i32
    return %c0_i32, %c0_i32_0 : i32, i32
  }
  func.func @transform_3(%arg0: i32, %arg1: i32) -> (i32, i32) {
    %c0_i32 = arith.constant 0 : i32
    %c0_i32_0 = arith.constant 0 : i32
    %c0_i32_1 = arith.constant 0 : i32
    return %c0_i32, %c0_i32_0 : i32, i32
  }
  func.func @transform_4(%arg0: i32, %arg1: i32) -> (i32, i32, i32) {
    %c0_i32 = arith.constant 0 : i32
    %c0_i32_0 = arith.constant 0 : i32
    return %arg0, %c0_i32, %arg1 : i32, i32, i32
  }
  func.func @transform_5(%arg0: i32, %arg1: i32) -> (i32, i32, i32, i32) {
    %c0_i32 = arith.constant 0 : i32
    %c0_i32_0 = arith.constant 0 : i32
    %c0_i32_1 = arith.constant 0 : i32
    return %arg0, %arg1, %c0_i32, %c0_i32_0 : i32, i32, i32, i32
  }
  func.func @transform_6(%arg0: i32, %arg1: i32) -> (i32, i32, i32, i32) {
    %c0_i32 = arith.constant 0 : i32
    %c0_i32_0 = arith.constant 0 : i32
    %c0_i32_1 = arith.constant 0 : i32
    return %arg0, %arg1, %c0_i32, %c0_i32_0 : i32, i32, i32, i32
  }
}

module attributes {stable_mosaic.version = 11 : i64} {
  func.func @_bn_relu_kernel(%arg0: i32, %arg1: i32, %arg2: memref<1x32x256xf32, #tpu.memory_space<vmem>>, %arg3: memref<32x1xf32, #tpu.memory_space<vmem>>, %arg4: memref<32x1xf32, #tpu.memory_space<vmem>>, %arg5: memref<1x32x256xf32, #tpu.memory_space<vmem>>) attributes {dimension_semantics = [#tpu.dimension_semantics<parallel>, #tpu.dimension_semantics<parallel>], iteration_bounds = array<i64: 2, 1>, scalar_prefetch = 0 : i64, scratch_operands = 0 : i64, tpu.core_type = #tpu.core_type<tc>, window_params = [{transform_indices = @transform_0, window_bounds = array<i64: 1, 32, 256>}, {pipeline_mode = #tpu.pipeline_mode<synchronous>, transform_indices = @transform_1, window_bounds = array<i64: 32, 1>}, {pipeline_mode = #tpu.pipeline_mode<synchronous>, transform_indices = @transform_2, window_bounds = array<i64: 32, 1>}, {transform_indices = @transform_3, window_bounds = array<i64: 1, 32, 256>}]} {
    %c0 = arith.constant 0 : index
    %c0_0 = arith.constant 0 : index
    %c0_1 = arith.constant 0 : index
    %0 = vector.load %arg2[%c0, %c0_0, %c0_1] : memref<1x32x256xf32, #tpu.memory_space<vmem>>, vector<1x32x256xf32>
    %1 = vector.shape_cast %0 : vector<1x32x256xf32> to vector<32x256xf32>
    %c0_2 = arith.constant 0 : index
    %c0_3 = arith.constant 0 : index
    %2 = vector.load %arg3[%c0_2, %c0_3] : memref<32x1xf32, #tpu.memory_space<vmem>>, vector<32x1xf32>
    %3 = vector.broadcast %2 : vector<32x1xf32> to vector<32x256xf32>
    %4 = arith.mulf %1, %3 : vector<32x256xf32>
    %c0_4 = arith.constant 0 : index
    %c0_5 = arith.constant 0 : index
    %5 = vector.load %arg4[%c0_4, %c0_5] : memref<32x1xf32, #tpu.memory_space<vmem>>, vector<32x1xf32>
    %6 = vector.broadcast %5 : vector<32x1xf32> to vector<32x256xf32>
    %7 = arith.addf %4, %6 : vector<32x256xf32>
    %cst = arith.constant 0.000000e+00 : f32
    %8 = vector.broadcast %cst : f32 to vector<32x256xf32>
    %9 = arith.maximumf %7, %8 : vector<32x256xf32>
    %c0_6 = arith.constant 0 : index
    %c0_7 = arith.constant 0 : index
    %c0_8 = arith.constant 0 : index
    %10 = vector.load %arg5[%c0_6, %c0_7, %c0_8] : memref<1x32x256xf32, #tpu.memory_space<vmem>>, vector<1x32x256xf32>
    %11 = vector.shape_cast %10 : vector<1x32x256xf32> to vector<32x256xf32>
    %12 = vector.shape_cast %9 : vector<32x256xf32> to vector<1x32x256xf32>
    tpu.vector_store %arg5[%c0_6, %c0_7, %c0_8], %12 {strides = array<i32>} : memref<1x32x256xf32, #tpu.memory_space<vmem>>, vector<1x32x256xf32>,
    return
  }
  func.func @transform_0(%arg0: i32, %arg1: i32) -> (i32, i32, i32) {
    %c0_i32 = arith.constant 0 : i32
    %c0_i32_0 = arith.constant 0 : i32
    return %arg0, %c0_i32, %arg1 : i32, i32, i32
  }
  func.func @transform_1(%arg0: i32, %arg1: i32) -> (i32, i32) {
    %c0_i32 = arith.constant 0 : i32
    %c0_i32_0 = arith.constant 0 : i32
    %c0_i32_1 = arith.constant 0 : i32
    return %c0_i32, %c0_i32_0 : i32, i32
  }
  func.func @transform_2(%arg0: i32, %arg1: i32) -> (i32, i32) {
    %c0_i32 = arith.constant 0 : i32
    %c0_i32_0 = arith.constant 0 : i32
    %c0_i32_1 = arith.constant 0 : i32
    return %c0_i32, %c0_i32_0 : i32, i32
  }
  func.func @transform_3(%arg0: i32, %arg1: i32) -> (i32, i32, i32) {
    %c0_i32 = arith.constant 0 : i32
    %c0_i32_0 = arith.constant 0 : i32
    return %arg0, %c0_i32, %arg1 : i32, i32, i32
  }
}

</mosaic_0001>

<llo_original>
// kernel: tile.18
$region0: #{tile.18}
  #allocation0 [shape = 's32[1]{0}', space=sflag, size = 0x4, scoped, tag = 'scoped memory for tile.18']
  %s0 = inlined_call_operand.vmem [shape: f32[8], index: 0, kind: input, shape index: {}]
  %s1 = inlined_call_operand.vmem [shape: f32[4,8], index: 1, kind: output, shape index: {}]
  // Predicated region
  $region2: #{tile.18} parent=0 // pred_check
    _
  $region3: #{tile.18} parent=0 // pred_check_branch
    %3 = sbr.rel (0) target = $region5
  $region4: #{tile.18} parent=0 // pred_region
    _
  $region5: #{tile.18} parent=0 // pred_fallthru
    _
  %v4 = vld [vmem:[%s0] ss:$0 sm:$0xff]
  %5 = vst [vmem:[%s1] sm:$0xf] %v4

// kernel: tile.19
$region0: #{tile.19}
  %s0 = inlined_call_operand.vmem [shape: f32[4,8], index: 0, kind: input, shape index: {}]
  %s1 = inlined_call_operand.vmem [shape: f32[1,32], index: 1, kind: output, shape index: {}]
  $region1: #{tile.19} parent=0
    #allocation0 [shape = 'u8[4096]{0}', space=vmem, size = 0x1000, scoped, tag = 'scoped mem for output reshape']
    #allocation1 [shape = 'u8[4096]{0}', space=vmem, size = 0x1000, scoped, tag = 'scoped mem for input reshape']
    %s3 = sshllo.u32 0, 4
    %v4 = vld [vmem:[%s0] sm:%s3]
    %5 = vst [vmem:[#allocation1] sm:%s3] %v4
    %v6 = vld [vmem:[#allocation1] sm:$0x1]
    %vm7 = vcmask 64512
    %8 = vst.msk [vmem:[#allocation0] sm:$0x1] %vm7, %v6
    %s9 = scalar_lea.vmem [#allocation1], 3
    %v10 = vld [vmem:[%s9] sm:$0x1]
    %11 = vrot.lane.b32.xlu0 %v10, 24
    %v12 = vpop.permute.xlu0 %11
    %vm13 = vcmask 261312
    %14 = vst.msk [vmem:[#allocation0] sm:$0x1] %vm13, %v12
    %s15 = scalar_lea.vmem [#allocation1], 2
    %v16 = vld [vmem:[%s15] sm:$0x1]
    %17 = vrot.lane.b32.xlu0 %v16, 16
    %v18 = vpop.permute.xlu0 %17
    %vm19 = vcmask 195712
    %20 = vst.msk [vmem:[#allocation0] sm:$0x1] %vm19, %v18
    %s21 = scalar_lea.vmem [#allocation1], 1
    %v22 = vld [vmem:[%s21] sm:$0x1]
    %23 = vrot.lane.b32.xlu0 %v22, 8
    %v24 = vpop.permute.xlu0 %23
    %vm25 = vcmask 130112
    %26 = vst.msk [vmem:[#allocation0] sm:$0x1] %vm25, %v24
    %s28 = sshllo.u32 0, 1
    %v30 = vld [vmem:[#allocation0] sm:%s28]
    %s31 = sshllo.u32 0, 1
    %32 = vst [vmem:[%s1] sm:%s31] %v30

// kernel: tile.0
$region0: #{tile.0}
  %s0 = inlined_call_operand.vmem [shape: f32[4,8], index: 0, kind: input, shape index: {}]
  %s1 = inlined_call_operand.vmem [shape: f32[32,1], index: 1, kind: output, shape index: {}]
  $region1: #{tile.0} parent=0
    #allocation0 [shape = 'u8[4096]{0}', space=vmem, size = 0x1000, scoped, tag = 'scoped mem for input reshape']
    %s3 = sshllo.u32 0, 4
    %v4 = vld [vmem:[%s0] sm:%s3]
    %5 = vst [vmem:[#allocation0] sm:%s3] %v4
    %v6 = vld [vmem:[#allocation0] sm:$0xf]
    %vm7 = vcmask 7168
    %8 = vst.msk [vmem:[%s1] ss:$8 sm:$0xf] %vm7, %v6
    %v9 = vld [vmem:[#allocation0] sm:$0xf]
    %10 = vrot.lane.b32.xlu0 %v9, 127
    %v11 = vpop.permute.xlu0 %10
    %vm12 = vcmask 7168
    %s13 = scalar_lea.vmem %s1, 1
    %14 = vst.msk [vmem:[%s13] ss:$8 sm:$0xf] %vm12, %v11
    %v15 = vld [vmem:[#allocation0] sm:$0xf]
    %16 = vrot.lane.b32.xlu0 %v15, 126
    %v17 = vpop.permute.xlu0 %16
    %vm18 = vcmask 7168
    %s19 = scalar_lea.vmem %s1, 2
    %20 = vst.msk [vmem:[%s19] ss:$8 sm:$0xf] %vm18, %v17
    %v21 = vld [vmem:[#allocation0] sm:$0xf]
    %22 = vrot.lane.b32.xlu0 %v21, 125
    %v23 = vpop.permute.xlu0 %22
    %vm24 = vcmask 7168
    %s25 = scalar_lea.vmem %s1, 3
    %26 = vst.msk [vmem:[%s25] ss:$8 sm:$0xf] %vm24, %v23
    %v27 = vld [vmem:[#allocation0] sm:$0xf]
    %28 = vrot.lane.b32.xlu0 %v27, 124
    %v29 = vpop.permute.xlu0 %28
    %vm30 = vcmask 7168
    %s31 = scalar_lea.vmem %s1, 4
    %32 = vst.msk [vmem:[%s31] ss:$8 sm:$0xf] %vm30, %v29
    %v33 = vld [vmem:[#allocation0] sm:$0xf]
    %34 = vrot.lane.b32.xlu0 %v33, 123
    %v35 = vpop.permute.xlu0 %34
    %vm36 = vcmask 7168
    %s37 = scalar_lea.vmem %s1, 5
    %38 = vst.msk [vmem:[%s37] ss:$8 sm:$0xf] %vm36, %v35
    %v39 = vld [vmem:[#allocation0] sm:$0xf]
    %40 = vrot.lane.b32.xlu0 %v39, 122
    %v41 = vpop.permute.xlu0 %40
    %vm42 = vcmask 7168
    %s43 = scalar_lea.vmem %s1, 6
    %44 = vst.msk [vmem:[%s43] ss:$8 sm:$0xf] %vm42, %v41
    %v45 = vld [vmem:[#allocation0] sm:$0xf]
    %46 = vrot.lane.b32.xlu0 %v45, 121
    %v47 = vpop.permute.xlu0 %46
    %vm48 = vcmask 7168
    %s49 = scalar_lea.vmem %s1, 7
    %50 = vst.msk [vmem:[%s49] ss:$8 sm:$0xf] %vm48, %v47

// kernel: upsampler_block_forward.3
$region0: #{upsampler_block_forward.3}
  #allocation0 [shape = 'u32[]', space=smem, size = 0x4, offset = 0x4, fixed_abs, tag = 'smem constant byte address 0x4 - core index']
  #allocation1 [shape = 'u32[144,128]{1,0:T(1,128)}', space=vmem, size = 0x12000, scoped, tag = 'internal scratch']
  %s0 = inlined_call_operand.vmem [shape: f32[2,32,256], index: 0, kind: input, shape index: {}]
  %s1 = inlined_call_operand.vmem [shape: f32[32,1], index: 1, kind: input, shape index: {}]
  %s2 = inlined_call_operand.vmem [shape: f32[32,1], index: 2, kind: input, shape index: {}]
  %s3 = inlined_call_operand.vmem [shape: f32[2,32,256], index: 3, kind: output, shape index: {}]
  %s4 = sld [smem:[#allocation0]]
  $region45: #{upsampler_block_forward.3} parent=0
    _
  %s6 = ssub.s32 1, %s4
  %s7 = scalar_select 0, %s6, %s4
  loop: start=0, step=1, limit=4
  $region2: #{upsampler_block_forward.3} parent=0 // loop_pre_header
    _
  $region3: #{upsampler_block_forward.3} parent=0 // loop_header
    %s9 = sphi 0, %s13
    %p10 = scmp.ge.s32.totalorder %s9, 4
    %s16 = sphi 0, %s28
    %s17 = sphi 0, %s24
    %s18 = sphi 0, %s16
    %s19 = sphi 0, %s17
    %s20 = sphi 0, %s18
    %s21 = sphi 0, %s19
    %s33 = sphi 0, %s35
    %s36 = sphi 0, %s33
    %s37 = sphi 0, %s36
    %s53 = sphi 0, %s37
    %s57 = sphi 0, %s57
    %s59 = sphi 0, %s57
    %s60 = sphi 0, %s59
    %s74 = sphi 0, %s60
    %s78 = sphi 0, %s78
    %s80 = sphi 0, %s78
    %s81 = sphi 0, %s80
    %s95 = sphi 0, %s81
    %s103 = sphi 0, %s105
    %s106 = sphi 0, %s103
    %s107 = sphi 0, %s106
    %s123 = sphi 0, %s107
  $region4: #{upsampler_block_forward.3} parent=0 // loop_header_branch
    %12 = sbr.rel (%p10) target = $region8
  $region5: #{upsampler_block_forward.3} parent=0 // loop_body
    %s14 = ssub.s32 %s9, 1
    %s15 = ssub.s32 %s9, 2
    %s22 = sadd.s32 1, %s17
    %p23 = scmp.ge.s32.totalorder %s22, 1
    %s24 = scalar_select %p23, 0, %s22
    %s25 = sadd.s32 1, %s16
    %s26 = scalar_select %p23, %s25, %s16
    %p27 = scmp.ge.s32.totalorder %s26, 2
    %s28 = scalar_select %p27, 0, %s26
    %s29 = ssub.s32 %s16, %s28
    %s30 = ssub.s32 %s17, %s24
    %s31 = sor.u32 %s29, %s30
    %p32 = scmp.eq.s32.totalorder %s31, 0
    %s34 = sadd.s32 %s33, 1
    %s35 = scalar_select %p32, %s33, %s34
    %p38 = pneg %p32
    %p39 = scmp.eq.s32.totalorder %s9, 1
    %p40 = por %p38, %p39
    %p41 = scmp.ne.s32.totalorder %s33, %s36
    %p42 = scmp.eq.s32.totalorder %s9, 0
    %p43 = por %p41, %p42
    %p44 = scmp.ne.s32.totalorder %s33, %s36
    %p45 = scmp.eq.s32.totalorder %s14, 1
    %p46 = por %p44, %p45
    %p47 = scmp.ne.s32.totalorder %s36, %s37
    %p48 = scmp.eq.s32.totalorder %s14, 0
    %p49 = por %p47, %p48
    %p50 = scmp.ne.s32.totalorder %s36, %s37
    %p51 = scmp.eq.s32.totalorder %s15, 1
    %p52 = por %p50, %p51
    %p54 = scmp.ne.s32.totalorder %s37, %s53
    %p55 = scmp.eq.s32.totalorder %s15, 0
    %p56 = por %p54, %p55
    %s58 = sadd.s32 %s57, 1
    %p61 = scmp.eq.s32.totalorder %s9, 1
    %p62 = scmp.ne.s32.totalorder %s57, %s59
    %p63 = scmp.eq.s32.totalorder %s9, 0
    %p64 = por %p62, %p63
    %p65 = scmp.ne.s32.totalorder %s57, %s59
    %p66 = scmp.eq.s32.totalorder %s14, 1
    %p67 = por %p65, %p66
    %p68 = scmp.ne.s32.totalorder %s59, %s60
    %p69 = scmp.eq.s32.totalorder %s14, 0
    %p70 = por %p68, %p69
    %p71 = scmp.ne.s32.totalorder %s59, %s60
    %p72 = scmp.eq.s32.totalorder %s15, 1
    %p73 = por %p71, %p72
    %p75 = scmp.ne.s32.totalorder %s60, %s74
    %p76 = scmp.eq.s32.totalorder %s15, 0
    %p77 = por %p75, %p76
    %s79 = sadd.s32 %s78, 1
    %p82 = scmp.eq.s32.totalorder %s9, 1
    %p83 = scmp.ne.s32.totalorder %s78, %s80
    %p84 = scmp.eq.s32.totalorder %s9, 0
    %p85 = por %p83, %p84
    %p86 = scmp.ne.s32.totalorder %s78, %s80
    %p87 = scmp.eq.s32.totalorder %s14, 1
    %p88 = por %p86, %p87
    %p89 = scmp.ne.s32.totalorder %s80, %s81
    %p90 = scmp.eq.s32.totalorder %s14, 0
    %p91 = por %p89, %p90
    %p92 = scmp.ne.s32.totalorder %s80, %s81
    %p93 = scmp.eq.s32.totalorder %s15, 1
    %p94 = por %p92, %p93
    %p96 = scmp.ne.s32.totalorder %s81, %s95
    %p97 = scmp.eq.s32.totalorder %s15, 0
    %p98 = por %p96, %p97
    %s99 = ssub.s32 %s16, %s28
    %s100 = ssub.s32 %s17, %s24
    %s101 = sor.u32 %s99, %s100
    %p102 = scmp.eq.s32.totalorder %s101, 0
    %s104 = sadd.s32 %s103, 1
    %s105 = scalar_select %p102, %s103, %s104
    %p108 = pneg %p102
    %p109 = scmp.eq.s32.totalorder %s9, 1
    %p110 = por %p108, %p109
    %p111 = scmp.ne.s32.totalorder %s103, %s106
    %p112 = scmp.eq.s32.totalorder %s9, 0
    %p113 = por %p111, %p112
    %p114 = scmp.ne.s32.totalorder %s103, %s106
    %p115 = scmp.eq.s32.totalorder %s14, 1
    %p116 = por %p114, %p115
    %p117 = scmp.ne.s32.totalorder %s106, %s107
    %p118 = scmp.eq.s32.totalorder %s14, 0
    %p119 = por %p117, %p118
    %p120 = scmp.ne.s32.totalorder %s106, %s107
    %p121 = scmp.eq.s32.totalorder %s15, 1
    %p122 = por %p120, %p121
    %p124 = scmp.ne.s32.totalorder %s107, %s123
    %p125 = scmp.eq.s32.totalorder %s15, 0
    %p126 = por %p124, %p125
    %p127 = scmp.le.s32.totalorder 1, %s9
    %p128 = scmp.lt.s32.totalorder %s9, 3
    %p129 = pnand %p127, %p128
    %p130 = pneg %p129
    // Predicated region
    $region9: #{upsampler_block_forward.3} parent=5 // pred_check
      _
    $region10: #{upsampler_block_forward.3} parent=5 // pred_check_branch
      %132 = sbr.rel (%p129) target = $region12
    $region11: #{upsampler_block_forward.3} parent=5 // pred_region
      %s133 = ssub.s32 %s9, 1
      // Predicated region
      $region13: #{upsampler_block_forward.3} parent=11 // pred_check
        %p134 = pneg %p70
      $region14: #{upsampler_block_forward.3} parent=11 // pred_check_branch
        %136 = sbr.rel (%p134) target = $region16
      $region15: #{upsampler_block_forward.3} parent=11 // pred_region
        _
      $region16: #{upsampler_block_forward.3} parent=11 // pred_fallthru
        _
      // Predicated region
      $region17: #{upsampler_block_forward.3} parent=11 // pred_check
        %p137 = pneg %p91
      $region18: #{upsampler_block_forward.3} parent=11 // pred_check_branch
        %139 = sbr.rel (%p137) target = $region20
      $region19: #{upsampler_block_forward.3} parent=11 // pred_region
        _
      $region20: #{upsampler_block_forward.3} parent=11 // pred_fallthru
        _
    $region12: #{upsampler_block_forward.3} parent=5 // pred_fallthru
      _
    %p140 = scmp.lt.s32.totalorder %s9, 2
    // Predicated region
    $region21: #{upsampler_block_forward.3} parent=5 // pred_check
      %p141 = pneg %p140
    $region22: #{upsampler_block_forward.3} parent=5 // pred_check_branch
      %143 = sbr.rel (%p141) target = $region24
    $region23: #{upsampler_block_forward.3} parent=5 // pred_region
      // Predicated region
      $region25: #{upsampler_block_forward.3} parent=23 // pred_check
        %p144 = pneg %p43
      $region26: #{upsampler_block_forward.3} parent=23 // pred_check_branch
        %146 = sbr.rel (%p144) target = $region28
      $region27: #{upsampler_block_forward.3} parent=23 // pred_region
        %s147 = smul.u32 2, %s17
        %p148 = scmp.lt.s32.totalorder %s16, 1
        %s149 = scalar_select %p148, %s16, 1
        %p150 = scmp.lt.s32.totalorder %s147, 1
        %s151 = scalar_select %p150, %s147, 1
        %s152 = smul.addr %s149, 8
        %s153 = sadd.s32 %s151, %s152
        %s154 = smul.addr %s153, 8
        %s155 = scalar_lea.vmem %s0, %s154
        %s156 = smul.u32 2, %s17
      $region28: #{upsampler_block_forward.3} parent=23 // pred_fallthru
        _
    $region24: #{upsampler_block_forward.3} parent=5 // pred_fallthru
      _
    %p157 = scmp.le.s32.totalorder 1, %s9
    %p158 = scmp.lt.s32.totalorder %s9, 3
    %p159 = pnand %p157, %p158
    %p160 = pneg %p159
    // Predicated region
    $region29: #{upsampler_block_forward.3} parent=5 // pred_check
      _
    $region30: #{upsampler_block_forward.3} parent=5 // pred_check_branch
      %162 = sbr.rel (%p159) target = $region32
    $region31: #{upsampler_block_forward.3} parent=5 // pred_region
      %s163 = ssub.s32 %s9, 1
      %s164 = smul.u32 2, %s19
      %p165 = scmp.lt.s32.totalorder %s18, 1
      %s166 = scalar_select %p165, %s18, 1
      %p167 = scmp.lt.s32.totalorder %s164, 1
      %s168 = scalar_select %p167, %s164, 1
      %s169 = smul.addr %s166, 8
      %s170 = sadd.s32 %s168, %s169
      %s171 = smul.addr %s170, 8
      %s172 = scalar_lea.vmem %s0, %s171
      %p173 = pneg %p49
      %p174 = pneg %p46
      %p175 = pneg %p70
      %p176 = pneg %p67
      %p177 = pneg %p91
      %p178 = pneg %p88
      %p179 = pneg %p119
      %p180 = pneg %p116
      %s181 = smul.u32 2, %s19
      %p182 = scmp.lt.s32.totalorder %s18, 1
      %s183 = scalar_select %p182, %s18, 1
      %p184 = scmp.lt.s32.totalorder %s181, 1
      %s185 = scalar_select %p184, %s181, 1
      %s186 = smul.addr %s183, 8
      %s187 = sadd.s32 %s185, %s186
      %s188 = smul.addr %s187, 8
      %s189 = scalar_lea.vmem %s3, %s188
      %s190 = smul.u32 2, %s19
      %p191 = scmp.lt.s32.totalorder %s18, 1
      %s192 = scalar_select %p191, %s18, 1
      %p193 = scmp.lt.s32.totalorder %s190, 1
      %s194 = scalar_select %p193, %s190, 1
      %s195 = smul.addr %s192, 8
      %s196 = sadd.s32 %s194, %s195
      %s197 = smul.addr %s196, 8
      %s198 = scalar_lea.vmem %s0, %s197
      %s199 = smul.u32 2, %s19
      %s200 = smul.u32 2, %s19
      %p201 = scmp.lt.s32.totalorder %s18, 1
      %s202 = scalar_select %p201, %s18, 1
      %p203 = scmp.lt.s32.totalorder %s200, 1
      %s204 = scalar_select %p203, %s200, 1
      %s205 = smul.addr %s202, 8
      %s206 = sadd.s32 %s204, %s205
      %s207 = smul.addr %s206, 8
      %s208 = scalar_lea.vmem %s3, %s207
      %s209 = smul.u32 2, %s19
      %v210 = vld [vmem:[%s198] sm:$0xff]
      %v211 = vld [vmem:[%s198 + $0x8] sm:$0xff]
      %v212 = vld [vmem:[%s198 + $0x10] sm:$0xff]
      %v213 = vld [vmem:[%s198 + $0x18] sm:$0xff]
      %v214 = vld [vmem:[%s198 + $0x20] sm:$0xff]
      %v215 = vld [vmem:[%s198 + $0x28] sm:$0xff]
      %v216 = vld [vmem:[%s198 + $0x30] sm:$0xff]
      %v217 = vld [vmem:[%s198 + $0x38] sm:$0xff]
      %v218 = vld [vmem:[%s1] sm:$0xff]
      %v219 = vld [vmem:[%s1 + $0x8] sm:$0xff]
      %v220 = vld [vmem:[%s1 + $0x10] sm:$0xff]
      %v221 = vld [vmem:[%s1 + $0x18] sm:$0xff]
      %223 = vset.pattern.permute.xlu0 0
      %224 = vperm.xlu0 %223, %v218
      %v225 = vpop.permute.xlu0 %224
      %228 = vset.pattern.permute.xlu0 0
      %229 = vperm.xlu0 %228, %v219
      %v230 = vpop.permute.xlu0 %229
      %233 = vset.pattern.permute.xlu0 0
      %234 = vperm.xlu0 %233, %v220
      %v235 = vpop.permute.xlu0 %234
      %238 = vset.pattern.permute.xlu0 0
      %239 = vperm.xlu0 %238, %v221
      %v240 = vpop.permute.xlu0 %239
      %v242 = vmul.f32 %v210, %v225
      %v243 = vmul.f32 %v211, %v225
      %v244 = vmul.f32 %v212, %v230
      %v245 = vmul.f32 %v213, %v230
      %v246 = vmul.f32 %v214, %v235
      %v247 = vmul.f32 %v215, %v235
      %v248 = vmul.f32 %v216, %v240
      %v249 = vmul.f32 %v217, %v240
      %v250 = vld [vmem:[%s2] sm:$0xff]
      %v251 = vld [vmem:[%s2 + $0x8] sm:$0xff]
      %v252 = vld [vmem:[%s2 + $0x10] sm:$0xff]
      %v253 = vld [vmem:[%s2 + $0x18] sm:$0xff]
      %255 = vset.pattern.permute.xlu0 0
      %256 = vperm.xlu0 %255, %v250
      %v257 = vpop.permute.xlu0 %256
      %260 = vset.pattern.permute.xlu0 0
      %261 = vperm.xlu0 %260, %v251
      %v262 = vpop.permute.xlu0 %261
      %265 = vset.pattern.permute.xlu0 0
      %266 = vperm.xlu0 %265, %v252
      %v267 = vpop.permute.xlu0 %266
      %270 = vset.pattern.permute.xlu0 0
      %271 = vperm.xlu0 %270, %v253
      %v272 = vpop.permute.xlu0 %271
      %v274 = vadd.f32 %v242, %v257
      %v275 = vadd.f32 %v243, %v257
      %v276 = vadd.f32 %v244, %v262
      %v277 = vadd.f32 %v245, %v262
      %v278 = vadd.f32 %v246, %v267
      %v279 = vadd.f32 %v247, %v267
      %v280 = vadd.f32 %v248, %v272
      %v281 = vadd.f32 %v249, %v272
      %v282 = vmax.f32 %v274, 0.0
      %v283 = vmax.f32 %v275, 0.0
      %v284 = vmax.f32 %v276, 0.0
      %v285 = vmax.f32 %v277, 0.0
      %v286 = vmax.f32 %v278, 0.0
      %v287 = vmax.f32 %v279, 0.0
      %v288 = vmax.f32 %v280, 0.0
      %v289 = vmax.f32 %v281, 0.0
      %290 = vst [vmem:[%s208] sm:$0xff] %v282
      %291 = vst [vmem:[%s208 + $0x8] sm:$0xff] %v283
      %292 = vst [vmem:[%s208 + $0x10] sm:$0xff] %v284
      %293 = vst [vmem:[%s208 + $0x18] sm:$0xff] %v285
      %294 = vst [vmem:[%s208 + $0x20] sm:$0xff] %v286
      %295 = vst [vmem:[%s208 + $0x28] sm:$0xff] %v287
      %296 = vst [vmem:[%s208 + $0x30] sm:$0xff] %v288
      %297 = vst [vmem:[%s208 + $0x38] sm:$0xff] %v289
      %s298 = smul.u32 2, %s19
      %p299 = scmp.lt.s32.totalorder %s18, 1
      %s300 = scalar_select %p299, %s18, 1
      %p301 = scmp.lt.s32.totalorder %s298, 1
      %s302 = scalar_select %p301, %s298, 1
      %s303 = smul.addr %s300, 8
      %s304 = sadd.s32 %s302, %s303
      %s305 = smul.addr %s304, 8
      %s306 = scalar_lea.vmem %s3, %s305
      // Predicated region
      $region33: #{upsampler_block_forward.3} parent=31 // pred_check
        %p307 = pneg %p116
      $region34: #{upsampler_block_forward.3} parent=31 // pred_check_branch
        %309 = sbr.rel (%p307) target = $region36
      $region35: #{upsampler_block_forward.3} parent=31 // pred_region
        %s310 = smul.u32 2, %s19
      $region36: #{upsampler_block_forward.3} parent=31 // pred_fallthru
        _
    $region32: #{upsampler_block_forward.3} parent=5 // pred_fallthru
      _
    %p311 = scmp.le.s32.totalorder 2, %s9
    // Predicated region
    $region37: #{upsampler_block_forward.3} parent=5 // pred_check
      %p312 = pneg %p311
    $region38: #{upsampler_block_forward.3} parent=5 // pred_check_branch
      %314 = sbr.rel (%p312) target = $region40
    $region39: #{upsampler_block_forward.3} parent=5 // pred_region
      %s315 = ssub.s32 %s9, 2
      // Predicated region
      $region41: #{upsampler_block_forward.3} parent=39 // pred_check
        %p316 = pneg %p122
      $region42: #{upsampler_block_forward.3} parent=39 // pred_check_branch
        %318 = sbr.rel (%p316) target = $region44
      $region43: #{upsampler_block_forward.3} parent=39 // pred_region
        %s319 = smul.u32 2, %s21
        %p320 = scmp.lt.s32.totalorder %s20, 1
        %s321 = scalar_select %p320, %s20, 1
        %p322 = scmp.lt.s32.totalorder %s319, 1
        %s323 = scalar_select %p322, %s319, 1
        %s324 = smul.addr %s321, 8
        %s325 = sadd.s32 %s323, %s324
        %s326 = smul.addr %s325, 8
        %s327 = scalar_lea.vmem %s3, %s326
      $region44: #{upsampler_block_forward.3} parent=39 // pred_fallthru
        _
    $region40: #{upsampler_block_forward.3} parent=5 // pred_fallthru
      _
  $region6: #{upsampler_block_forward.3} parent=0 // loop_footer
    %s13 = sadd.s32 1, %s9
  $region7: #{upsampler_block_forward.3} parent=0 // loop_footer_branch
    %8 = sbr.rel target = $region3
  $region8: #{upsampler_block_forward.3} parent=0 // loop_exit
    _

// kernel: upsampler_block_forward.2
$region0: #{upsampler_block_forward.2}
  #allocation0 [shape = 'u32[]', space=smem, size = 0x4, offset = 0x4, fixed_abs, tag = 'smem constant byte address 0x4 - core index']
  #allocation1 [shape = 'u32[144,128]{1,0:T(1,128)}', space=vmem, size = 0x12000, scoped, tag = 'internal scratch']
  %s0 = inlined_call_operand.vmem [shape: f32[2,17,17,4], index: 0, kind: input, shape index: {}, may-alias: {0,1}]
  %s1 = inlined_call_operand.vmem [shape: f32[2,17,17,4], index: 1, kind: input, shape index: {}, may-alias: {0,1}]
  %s2 = inlined_call_operand.vmem [shape: f32[16,32], index: 2, kind: input, shape index: {}]
  %s3 = inlined_call_operand.vmem [shape: f32[1,32], index: 3, kind: input, shape index: {}]
  %s4 = inlined_call_operand.vmem [shape: f32[2,32,256], index: 4, kind: output, shape index: {0}]
  %s5 = inlined_call_operand.vmem [shape: f32[2,1,1,32], index: 5, kind: output, shape index: {1}]
  %s6 = inlined_call_operand.vmem [shape: f32[2,1,1,32], index: 6, kind: output, shape index: {2}]
  %7 = xla_tuple %s4, %s5, %s6
  %s8 = sld [smem:[#allocation0]]
  $region65: #{upsampler_block_forward.2} parent=0
    _
  %s10 = ssub.s32 1, %s8
  %s11 = scalar_select 0, %s10, %s8
  loop: start=0, step=1, limit=4
  $region2: #{upsampler_block_forward.2} parent=0 // loop_pre_header
    _
  $region3: #{upsampler_block_forward.2} parent=0 // loop_header
    %s13 = sphi 0, %s17
    %p14 = scmp.ge.s32.totalorder %s13, 4
    %s20 = sphi 0, %s32
    %s21 = sphi 0, %s28
    %s22 = sphi 0, %s20
    %s23 = sphi 0, %s21
    %s24 = sphi 0, %s22
    %s25 = sphi 0, %s23
    %s37 = sphi 0, %s39
    %s40 = sphi 0, %s37
    %s41 = sphi 0, %s40
    %s57 = sphi 0, %s41
    %s69 = sphi 0, %s71
    %s72 = sphi 0, %s69
    %s73 = sphi 0, %s72
    %s89 = sphi 0, %s73
    %s93 = sphi 0, %s93
    %s95 = sphi 0, %s93
    %s96 = sphi 0, %s95
    %s110 = sphi 0, %s96
    %s114 = sphi 0, %s114
    %s116 = sphi 0, %s114
    %s117 = sphi 0, %s116
    %s131 = sphi 0, %s117
    %s139 = sphi 0, %s141
    %s142 = sphi 0, %s139
    %s143 = sphi 0, %s142
    %s159 = sphi 0, %s143
    %s167 = sphi 0, %s169
    %s170 = sphi 0, %s167
    %s171 = sphi 0, %s170
    %s187 = sphi 0, %s171
    %s195 = sphi 0, %s197
    %s198 = sphi 0, %s195
    %s199 = sphi 0, %s198
    %s215 = sphi 0, %s199
  $region4: #{upsampler_block_forward.2} parent=0 // loop_header_branch
    %16 = sbr.rel (%p14) target = $region8
  $region5: #{upsampler_block_forward.2} parent=0 // loop_body
    %s18 = ssub.s32 %s13, 1
    %s19 = ssub.s32 %s13, 2
    %s26 = sadd.s32 1, %s21
    %p27 = scmp.ge.s32.totalorder %s26, 1
    %s28 = scalar_select %p27, 0, %s26
    %s29 = sadd.s32 1, %s20
    %s30 = scalar_select %p27, %s29, %s20
    %p31 = scmp.ge.s32.totalorder %s30, 2
    %s32 = scalar_select %p31, 0, %s30
    %s33 = ssub.s32 %s20, %s32
    %s34 = ssub.s32 %s21, %s28
    %s35 = sor.u32 %s33, %s34
    %p36 = scmp.eq.s32.totalorder %s35, 0
    %s38 = sadd.s32 %s37, 1
    %s39 = scalar_select %p36, %s37, %s38
    %p42 = pneg %p36
    %p43 = scmp.eq.s32.totalorder %s13, 1
    %p44 = por %p42, %p43
    %p45 = scmp.ne.s32.totalorder %s37, %s40
    %p46 = scmp.eq.s32.totalorder %s13, 0
    %p47 = por %p45, %p46
    %p48 = scmp.ne.s32.totalorder %s37, %s40
    %p49 = scmp.eq.s32.totalorder %s18, 1
    %p50 = por %p48, %p49
    %p51 = scmp.ne.s32.totalorder %s40, %s41
    %p52 = scmp.eq.s32.totalorder %s18, 0
    %p53 = por %p51, %p52
    %p54 = scmp.ne.s32.totalorder %s40, %s41
    %p55 = scmp.eq.s32.totalorder %s19, 1
    %p56 = por %p54, %p55
    %p58 = scmp.ne.s32.totalorder %s41, %s57
    %p59 = scmp.eq.s32.totalorder %s19, 0
    %p60 = por %p58, %p59
    %s61 = sadd.s32 %s21, 1
    %s62 = smul.u32 %s61, 16
    %s63 = sadd.s32 %s28, 1
    %s64 = smul.u32 %s63, 16
    %s65 = ssub.s32 %s20, %s32
    %s66 = ssub.s32 %s62, %s64
    %s67 = sor.u32 %s65, %s66
    %p68 = scmp.eq.s32.totalorder %s67, 0
    %s70 = sadd.s32 %s69, 1
    %s71 = scalar_select %p68, %s69, %s70
    %p74 = pneg %p68
    %p75 = scmp.eq.s32.totalorder %s13, 1
    %p76 = por %p74, %p75
    %p77 = scmp.ne.s32.totalorder %s69, %s72
    %p78 = scmp.eq.s32.totalorder %s13, 0
    %p79 = por %p77, %p78
    %p80 = scmp.ne.s32.totalorder %s69, %s72
    %p81 = scmp.eq.s32.totalorder %s18, 1
    %p82 = por %p80, %p81
    %p83 = scmp.ne.s32.totalorder %s72, %s73
    %p84 = scmp.eq.s32.totalorder %s18, 0
    %p85 = por %p83, %p84
    %p86 = scmp.ne.s32.totalorder %s72, %s73
    %p87 = scmp.eq.s32.totalorder %s19, 1
    %p88 = por %p86, %p87
    %p90 = scmp.ne.s32.totalorder %s73, %s89
    %p91 = scmp.eq.s32.totalorder %s19, 0
    %p92 = por %p90, %p91
    %s94 = sadd.s32 %s93, 1
    %p97 = scmp.eq.s32.totalorder %s13, 1
    %p98 = scmp.ne.s32.totalorder %s93, %s95
    %p99 = scmp.eq.s32.totalorder %s13, 0
    %p100 = por %p98, %p99
    %p101 = scmp.ne.s32.totalorder %s93, %s95
    %p102 = scmp.eq.s32.totalorder %s18, 1
    %p103 = por %p101, %p102
    %p104 = scmp.ne.s32.totalorder %s95, %s96
    %p105 = scmp.eq.s32.totalorder %s18, 0
    %p106 = por %p104, %p105
    %p107 = scmp.ne.s32.totalorder %s95, %s96
    %p108 = scmp.eq.s32.totalorder %s19, 1
    %p109 = por %p107, %p108
    %p111 = scmp.ne.s32.totalorder %s96, %s110
    %p112 = scmp.eq.s32.totalorder %s19, 0
    %p113 = por %p111, %p112
    %s115 = sadd.s32 %s114, 1
    %p118 = scmp.eq.s32.totalorder %s13, 1
    %p119 = scmp.ne.s32.totalorder %s114, %s116
    %p120 = scmp.eq.s32.totalorder %s13, 0
    %p121 = por %p119, %p120
    %p122 = scmp.ne.s32.totalorder %s114, %s116
    %p123 = scmp.eq.s32.totalorder %s18, 1
    %p124 = por %p122, %p123
    %p125 = scmp.ne.s32.totalorder %s116, %s117
    %p126 = scmp.eq.s32.totalorder %s18, 0
    %p127 = por %p125, %p126
    %p128 = scmp.ne.s32.totalorder %s116, %s117
    %p129 = scmp.eq.s32.totalorder %s19, 1
    %p130 = por %p128, %p129
    %p132 = scmp.ne.s32.totalorder %s117, %s131
    %p133 = scmp.eq.s32.totalorder %s19, 0
    %p134 = por %p132, %p133
    %s135 = ssub.s32 %s20, %s32
    %s136 = ssub.s32 %s21, %s28
    %s137 = sor.u32 %s135, %s136
    %p138 = scmp.eq.s32.totalorder %s137, 0
    %s140 = sadd.s32 %s139, 1
    %s141 = scalar_select %p138, %s139, %s140
    %p144 = pneg %p138
    %p145 = scmp.eq.s32.totalorder %s13, 1
    %p146 = por %p144, %p145
    %p147 = scmp.ne.s32.totalorder %s139, %s142
    %p148 = scmp.eq.s32.totalorder %s13, 0
    %p149 = por %p147, %p148
    %p150 = scmp.ne.s32.totalorder %s139, %s142
    %p151 = scmp.eq.s32.totalorder %s18, 1
    %p152 = por %p150, %p151
    %p153 = scmp.ne.s32.totalorder %s142, %s143
    %p154 = scmp.eq.s32.totalorder %s18, 0
    %p155 = por %p153, %p154
    %p156 = scmp.ne.s32.totalorder %s142, %s143
    %p157 = scmp.eq.s32.totalorder %s19, 1
    %p158 = por %p156, %p157
    %p160 = scmp.ne.s32.totalorder %s143, %s159
    %p161 = scmp.eq.s32.totalorder %s19, 0
    %p162 = por %p160, %p161
    %s163 = ssub.s32 %s20, %s32
    %s164 = ssub.s32 %s21, %s28
    %s165 = sor.u32 %s163, %s164
    %p166 = scmp.eq.s32.totalorder %s165, 0
    %s168 = sadd.s32 %s167, 1
    %s169 = scalar_select %p166, %s167, %s168
    %p172 = pneg %p166
    %p173 = scmp.eq.s32.totalorder %s13, 1
    %p174 = por %p172, %p173
    %p175 = scmp.ne.s32.totalorder %s167, %s170
    %p176 = scmp.eq.s32.totalorder %s13, 0
    %p177 = por %p175, %p176
    %p178 = scmp.ne.s32.totalorder %s167, %s170
    %p179 = scmp.eq.s32.totalorder %s18, 1
    %p180 = por %p178, %p179
    %p181 = scmp.ne.s32.totalorder %s170, %s171
    %p182 = scmp.eq.s32.totalorder %s18, 0
    %p183 = por %p181, %p182
    %p184 = scmp.ne.s32.totalorder %s170, %s171
    %p185 = scmp.eq.s32.totalorder %s19, 1
    %p186 = por %p184, %p185
    %p188 = scmp.ne.s32.totalorder %s171, %s187
    %p189 = scmp.eq.s32.totalorder %s19, 0
    %p190 = por %p188, %p189
    %s191 = ssub.s32 %s20, %s32
    %s192 = ssub.s32 %s21, %s28
    %s193 = sor.u32 %s191, %s192
    %p194 = scmp.eq.s32.totalorder %s193, 0
    %s196 = sadd.s32 %s195, 1
    %s197 = scalar_select %p194, %s195, %s196
    %p200 = pneg %p194
    %p201 = scmp.eq.s32.totalorder %s13, 1
    %p202 = por %p200, %p201
    %p203 = scmp.ne.s32.totalorder %s195, %s198
    %p204 = scmp.eq.s32.totalorder %s13, 0
    %p205 = por %p203, %p204
    %p206 = scmp.ne.s32.totalorder %s195, %s198
    %p207 = scmp.eq.s32.totalorder %s18, 1
    %p208 = por %p206, %p207
    %p209 = scmp.ne.s32.totalorder %s198, %s199
    %p210 = scmp.eq.s32.totalorder %s18, 0
    %p211 = por %p209, %p210
    %p212 = scmp.ne.s32.totalorder %s198, %s199
    %p213 = scmp.eq.s32.totalorder %s19, 1
    %p214 = por %p212, %p213
    %p216 = scmp.ne.s32.totalorder %s199, %s215
    %p217 = scmp.eq.s32.totalorder %s19, 0
    %p218 = por %p216, %p217
    %p219 = scmp.le.s32.totalorder 1, %s13
    %p220 = scmp.lt.s32.totalorder %s13, 3
    %p221 = pnand %p219, %p220
    %p222 = pneg %p221
    // Predicated region
    $region9: #{upsampler_block_forward.2} parent=5 // pred_check
      _
    $region10: #{upsampler_block_forward.2} parent=5 // pred_check_branch
      %224 = sbr.rel (%p221) target = $region12
    $region11: #{upsampler_block_forward.2} parent=5 // pred_region
      %s225 = ssub.s32 %s13, 1
      // Predicated region
      $region13: #{upsampler_block_forward.2} parent=11 // pred_check
        %p226 = pneg %p106
      $region14: #{upsampler_block_forward.2} parent=11 // pred_check_branch
        %228 = sbr.rel (%p226) target = $region16
      $region15: #{upsampler_block_forward.2} parent=11 // pred_region
        _
      $region16: #{upsampler_block_forward.2} parent=11 // pred_fallthru
        _
      // Predicated region
      $region17: #{upsampler_block_forward.2} parent=11 // pred_check
        %p229 = pneg %p127
      $region18: #{upsampler_block_forward.2} parent=11 // pred_check_branch
        %231 = sbr.rel (%p229) target = $region20
      $region19: #{upsampler_block_forward.2} parent=11 // pred_region
        _
      $region20: #{upsampler_block_forward.2} parent=11 // pred_fallthru
        _
    $region12: #{upsampler_block_forward.2} parent=5 // pred_fallthru
      _
    %p232 = scmp.lt.s32.totalorder %s13, 2
    // Predicated region
    $region21: #{upsampler_block_forward.2} parent=5 // pred_check
      %p233 = pneg %p232
    $region22: #{upsampler_block_forward.2} parent=5 // pred_check_branch
      %235 = sbr.rel (%p233) target = $region24
    $region23: #{upsampler_block_forward.2} parent=5 // pred_region
      // Predicated region
      $region25: #{upsampler_block_forward.2} parent=23 // pred_check
        %p236 = pneg %p47
      $region26: #{upsampler_block_forward.2} parent=23 // pred_check_branch
        %238 = sbr.rel (%p236) target = $region28
      $region27: #{upsampler_block_forward.2} parent=23 // pred_region
        %s239 = smul.u32 16, %s21
        %s240 = ssub.s32 17, %s239
        %p241 = scmp.lt.s32.totalorder %s240, 16
        %s242 = scalar_select %p241, %s240, 16
        %s243 = smul.u32 128, %s242
        %s244 = smul.u32 %s243, 3
        %p245 = scmp.lt.s32.totalorder %s20, 1
        %s246 = scalar_select %p245, %s20, 1
        %p247 = scmp.lt.s32.totalorder %s239, 16
        %s248 = scalar_select %p247, %s239, 16
        %s249 = smul.addr %s248, 3
        %s250 = smul.addr %s246, 51
        %s251 = sadd.s32 %s249, %s250
        %s252 = smul.addr %s251, 8
        %s253 = scalar_lea.vmem %s0, %s252
        %s254 = smul.u32 16, %s21
        %s255 = ssub.s32 17, %s254
        %p256 = scmp.lt.s32.totalorder %s255, 16
        %s257 = scalar_select %p256, %s255, 16
        %s258 = smul.u32 128, %s257
        %s259 = smul.u32 %s258, 3
      $region28: #{upsampler_block_forward.2} parent=23 // pred_fallthru
        _
      // Predicated region
      $region29: #{upsampler_block_forward.2} parent=23 // pred_check
        %p260 = pneg %p79
      $region30: #{upsampler_block_forward.2} parent=23 // pred_check_branch
        %262 = sbr.rel (%p260) target = $region32
      $region31: #{upsampler_block_forward.2} parent=23 // pred_region
        %s263 = sadd.s32 %s21, 1
        %s264 = smul.u32 %s263, 16
        %p265 = scmp.lt.s32.totalorder %s20, 1
        %s266 = scalar_select %p265, %s20, 1
        %p267 = scmp.lt.s32.totalorder %s264, 16
        %s268 = scalar_select %p267, %s264, 16
        %s269 = smul.addr %s268, 3
        %s270 = smul.addr %s266, 51
        %s271 = sadd.s32 %s269, %s270
        %s272 = smul.addr %s271, 8
        %s273 = scalar_lea.vmem %s1, %s272
        %s274 = sadd.s32 %s21, 1
        %s275 = smul.u32 %s274, 16
      $region32: #{upsampler_block_forward.2} parent=23 // pred_fallthru
        _
    $region24: #{upsampler_block_forward.2} parent=5 // pred_fallthru
      _
    %p276 = scmp.le.s32.totalorder 1, %s13
    %p277 = scmp.lt.s32.totalorder %s13, 3
    %p278 = pnand %p276, %p277
    %p279 = pneg %p278
    // Predicated region
    $region33: #{upsampler_block_forward.2} parent=5 // pred_check
      _
    $region34: #{upsampler_block_forward.2} parent=5 // pred_check_branch
      %281 = sbr.rel (%p278) target = $region36
    $region35: #{upsampler_block_forward.2} parent=5 // pred_region
      %s282 = ssub.s32 %s13, 1
      %s283 = smul.u32 16, %s23
      %s284 = ssub.s32 17, %s283
      %p285 = scmp.lt.s32.totalorder %s284, 16
      %s286 = scalar_select %p285, %s284, 16
      %s287 = smul.u32 128, %s286
      %s288 = smul.u32 %s287, 3
      %p289 = scmp.lt.s32.totalorder %s22, 1
      %s290 = scalar_select %p289, %s22, 1
      %p291 = scmp.lt.s32.totalorder %s283, 16
      %s292 = scalar_select %p291, %s283, 16
      %s293 = smul.addr %s292, 3
      %s294 = smul.addr %s290, 51
      %s295 = sadd.s32 %s293, %s294
      %s296 = smul.addr %s295, 8
      %s297 = scalar_lea.vmem %s0, %s296
      %p298 = pneg %p53
      %p299 = pneg %p50
      %s300 = sadd.s32 %s23, 1
      %s301 = smul.u32 %s300, 16
      %p302 = scmp.lt.s32.totalorder %s22, 1
      %s303 = scalar_select %p302, %s22, 1
      %p304 = scmp.lt.s32.totalorder %s301, 16
      %s305 = scalar_select %p304, %s301, 16
      %s306 = smul.addr %s305, 3
      %s307 = smul.addr %s303, 51
      %s308 = sadd.s32 %s306, %s307
      %s309 = smul.addr %s308, 8
      %s310 = scalar_lea.vmem %s1, %s309
      %p311 = pneg %p85
      %p312 = pneg %p82
      %p313 = pneg %p106
      %p314 = pneg %p103
      %p315 = pneg %p127
      %p316 = pneg %p124
      %p317 = pneg %p155
      %p318 = pneg %p152
      %s319 = smul.u32 2, %s23
      %p320 = scmp.lt.s32.totalorder %s22, 1
      %s321 = scalar_select %p320, %s22, 1
      %p322 = scmp.lt.s32.totalorder %s319, 1
      %s323 = scalar_select %p322, %s319, 1
      %s324 = smul.addr %s321, 8
      %s325 = sadd.s32 %s323, %s324
      %s326 = smul.addr %s325, 8
      %s327 = scalar_lea.vmem %s4, %s326
      %p328 = pneg %p183
      %p329 = pneg %p180
      %p330 = scmp.lt.s32.totalorder %s22, 1
      %s331 = scalar_select %p330, %s22, 1
      %p332 = scmp.lt.s32.totalorder %s23, 0
      %s333 = scalar_select %p332, %s23, 0
      %s334 = sadd.s32 %s333, %s331
      %s335 = scalar_lea.vmem %s5, %s334
      %p336 = pneg %p211
      %p337 = pneg %p208
      %p338 = scmp.lt.s32.totalorder %s22, 1
      %s339 = scalar_select %p338, %s22, 1
      %p340 = scmp.lt.s32.totalorder %s23, 0
      %s341 = scalar_select %p340, %s23, 0
      %s342 = sadd.s32 %s341, %s339
      %s343 = scalar_lea.vmem %s6, %s342
      %s344 = smul.u32 16, %s23
      %s345 = ssub.s32 17, %s344
      %p346 = scmp.lt.s32.totalorder %s345, 16
      %s347 = scalar_select %p346, %s345, 16
      %s348 = smul.u32 128, %s347
      %s349 = smul.u32 %s348, 3
      %p350 = scmp.lt.s32.totalorder %s22, 1
      %s351 = scalar_select %p350, %s22, 1
      %p352 = scmp.lt.s32.totalorder %s344, 16
      %s353 = scalar_select %p352, %s344, 16
      %s354 = smul.addr %s353, 3
      %s355 = smul.addr %s351, 51
      %s356 = sadd.s32 %s354, %s355
      %s357 = smul.addr %s356, 8
      %s358 = scalar_lea.vmem %s0, %s357
      %s359 = smul.u32 16, %s23
      %s360 = ssub.s32 17, %s359
      %p361 = scmp.lt.s32.totalorder %s360, 16
      %s362 = scalar_select %p361, %s360, 16
      %s363 = smul.u32 128, %s362
      %s364 = smul.u32 %s363, 3
      %s365 = sadd.s32 %s23, 1
      %s366 = smul.u32 %s365, 16
      %p367 = scmp.lt.s32.totalorder %s22, 1
      %s368 = scalar_select %p367, %s22, 1
      %p369 = scmp.lt.s32.totalorder %s366, 16
      %s370 = scalar_select %p369, %s366, 16
      %s371 = smul.addr %s370, 3
      %s372 = smul.addr %s368, 51
      %s373 = sadd.s32 %s371, %s372
      %s374 = smul.addr %s373, 8
      %s375 = scalar_lea.vmem %s1, %s374
      %s376 = sadd.s32 %s23, 1
      %s377 = smul.u32 %s376, 16
      %s378 = smul.u32 2, %s23
      %p379 = scmp.lt.s32.totalorder %s22, 1
      %s380 = scalar_select %p379, %s22, 1
      %p381 = scmp.lt.s32.totalorder %s378, 1
      %s382 = scalar_select %p381, %s378, 1
      %s383 = smul.addr %s380, 8
      %s384 = sadd.s32 %s382, %s383
      %s385 = smul.addr %s384, 8
      %s386 = scalar_lea.vmem %s4, %s385
      %s387 = smul.u32 2, %s23
      %p388 = scmp.lt.s32.totalorder %s22, 1
      %s389 = scalar_select %p388, %s22, 1
      %p390 = scmp.lt.s32.totalorder %s23, 0
      %s391 = scalar_select %p390, %s23, 0
      %s392 = sadd.s32 %s391, %s389
      %s393 = scalar_lea.vmem %s5, %s392
      %p394 = scmp.lt.s32.totalorder %s22, 1
      %s395 = scalar_select %p394, %s22, 1
      %p396 = scmp.lt.s32.totalorder %s23, 0
      %s397 = scalar_select %p396, %s23, 0
      %s398 = sadd.s32 %s397, %s395
      %s399 = scalar_lea.vmem %s6, %s398
      %v400 = vld [vmem:[%s358] sm:$0xff]
      %v401 = vld [vmem:[%s358 + $0x8] sm:$0xff]
      %v402 = vld [vmem:[%s358 + $0x10] sm:$0x1]
      %v403 = vld [vmem:[%s358 + $0x18] sm:$0xff]
      %v404 = vld [vmem:[%s358 + $0x20] sm:$0xff]
      %v405 = vld [vmem:[%s358 + $0x28] sm:$0x1]
      %v406 = vld [vmem:[%s358 + $0x30] sm:$0xff]
      %v407 = vld [vmem:[%s358 + $0x38] sm:$0xff]
      %v408 = vld [vmem:[%s358 + $0x40] sm:$0x1]
      %v409 = vld [vmem:[%s358 + $0x48] sm:$0xff]
      %v410 = vld [vmem:[%s358 + $0x50] sm:$0xff]
      %v411 = vld [vmem:[%s358 + $0x58] sm:$0x1]
      %v412 = vld [vmem:[%s358 + $0x60] sm:$0xff]
      %v413 = vld [vmem:[%s358 + $0x68] sm:$0xff]
      %v414 = vld [vmem:[%s358 + $0x70] sm:$0x1]
      %v415 = vld [vmem:[%s358 + $0x78] sm:$0xff]
      %v416 = vld [vmem:[%s358 + $0x80] sm:$0xff]
      %v417 = vld [vmem:[%s358 + $0x88] sm:$0x1]
      %v418 = vld [vmem:[%s358 + $0x90] sm:$0xff]
      %v419 = vld [vmem:[%s358 + $0x98] sm:$0xff]
      %v420 = vld [vmem:[%s358 + $0xa0] sm:$0x1]
      %v421 = vld [vmem:[%s358 + $0xa8] sm:$0xff]
      %v422 = vld [vmem:[%s358 + $0xb0] sm:$0xff]
      %v423 = vld [vmem:[%s358 + $0xb8] sm:$0x1]
      %v424 = vld [vmem:[%s358 + $0xc0] sm:$0xff]
      %v425 = vld [vmem:[%s358 + $0xc8] sm:$0xff]
      %v426 = vld [vmem:[%s358 + $0xd0] sm:$0x1]
      %v427 = vld [vmem:[%s358 + $0xd8] sm:$0xff]
      %v428 = vld [vmem:[%s358 + $0xe0] sm:$0xff]
      %v429 = vld [vmem:[%s358 + $0xe8] sm:$0x1]
      %v430 = vld [vmem:[%s358 + $0xf0] sm:$0xff]
      %v431 = vld [vmem:[%s358 + $0xf8] sm:$0xff]
      %v432 = vld [vmem:[%s358 + $0x100] sm:$0x1]
      %v433 = vld [vmem:[%s358 + $0x108] sm:$0xff]
      %v434 = vld [vmem:[%s358 + $0x110] sm:$0xff]
      %v435 = vld [vmem:[%s358 + $0x118] sm:$0x1]
      %v436 = vld [vmem:[%s358 + $0x120] sm:$0xff]
      %v437 = vld [vmem:[%s358 + $0x128] sm:$0xff]
      %v438 = vld [vmem:[%s358 + $0x130] sm:$0x1]
      %v439 = vld [vmem:[%s358 + $0x138] sm:$0xff]
      %v440 = vld [vmem:[%s358 + $0x140] sm:$0xff]
      %v441 = vld [vmem:[%s358 + $0x148] sm:$0x1]
      %v442 = vld [vmem:[%s358 + $0x150] sm:$0xff]
      %v443 = vld [vmem:[%s358 + $0x158] sm:$0xff]
      %v444 = vld [vmem:[%s358 + $0x160] sm:$0x1]
      %v445 = vld [vmem:[%s358 + $0x168] sm:$0xff]
      %v446 = vld [vmem:[%s358 + $0x170] sm:$0xff]
      %v447 = vld [vmem:[%s358 + $0x178] sm:$0x1]
      %v448 = vld [vmem:[%s375] sm:$0xff]
      %v449 = vld [vmem:[%s375 + $0x8] sm:$0xff]
      %v450 = vld [vmem:[%s375 + $0x10] sm:$0x1]
      %vm499 = vcmask 1046528
      %v500 = vrot.slane %v400, 1
      %v501 = vrot.slane %v401, 1
      %v502 = vsel %vm499, %v500, %v501
      %v503 = vrot.slane %v402, 1
      %v504 = vsel %vm499, %v501, %v503
      %v505 = vrot.slane %v403, 1
      %v506 = vrot.slane %v404, 1
      %v507 = vsel %vm499, %v505, %v506
      %v508 = vrot.slane %v405, 1
      %v509 = vsel %vm499, %v506, %v508
      %v510 = vrot.slane %v406, 1
      %v511 = vrot.slane %v407, 1
      %v512 = vsel %vm499, %v510, %v511
      %v513 = vrot.slane %v408, 1
      %v514 = vsel %vm499, %v511, %v513
      %v515 = vrot.slane %v409, 1
      %v516 = vrot.slane %v410, 1
      %v517 = vsel %vm499, %v515, %v516
      %v518 = vrot.slane %v411, 1
      %v519 = vsel %vm499, %v516, %v518
      %v520 = vrot.slane %v412, 1
      %v521 = vrot.slane %v413, 1
      %v522 = vsel %vm499, %v520, %v521
      %v523 = vrot.slane %v414, 1
      %v524 = vsel %vm499, %v521, %v523
      %v525 = vrot.slane %v415, 1
      %v526 = vrot.slane %v416, 1
      %v527 = vsel %vm499, %v525, %v526
      %v528 = vrot.slane %v417, 1
      %v529 = vsel %vm499, %v526, %v528
      %v530 = vrot.slane %v418, 1
      %v531 = vrot.slane %v419, 1
      %v532 = vsel %vm499, %v530, %v531
      %v533 = vrot.slane %v420, 1
      %v534 = vsel %vm499, %v531, %v533
      %v535 = vrot.slane %v421, 1
      %v536 = vrot.slane %v422, 1
      %v537 = vsel %vm499, %v535, %v536
      %v538 = vrot.slane %v423, 1
      %v539 = vsel %vm499, %v536, %v538
      %v540 = vrot.slane %v424, 1
      %v541 = vrot.slane %v425, 1
      %v542 = vsel %vm499, %v540, %v541
      %v543 = vrot.slane %v426, 1
      %v544 = vsel %vm499, %v541, %v543
      %v545 = vrot.slane %v427, 1
      %v546 = vrot.slane %v428, 1
      %v547 = vsel %vm499, %v545, %v546
      %v548 = vrot.slane %v429, 1
      %v549 = vsel %vm499, %v546, %v548
      %v550 = vrot.slane %v430, 1
      %v551 = vrot.slane %v431, 1
      %v552 = vsel %vm499, %v550, %v551
      %v553 = vrot.slane %v432, 1
      %v554 = vsel %vm499, %v551, %v553
      %v555 = vrot.slane %v433, 1
      %v556 = vrot.slane %v434, 1
      %v557 = vsel %vm499, %v555, %v556
      %v558 = vrot.slane %v435, 1
      %v559 = vsel %vm499, %v556, %v558
      %v560 = vrot.slane %v436, 1
      %v561 = vrot.slane %v437, 1
      %v562 = vsel %vm499, %v560, %v561
      %v563 = vrot.slane %v438, 1
      %v564 = vsel %vm499, %v561, %v563
      %v565 = vrot.slane %v439, 1
      %v566 = vrot.slane %v440, 1
      %v567 = vsel %vm499, %v565, %v566
      %v568 = vrot.slane %v441, 1
      %v569 = vsel %vm499, %v566, %v568
      %v570 = vrot.slane %v442, 1
      %v571 = vrot.slane %v443, 1
      %v572 = vsel %vm499, %v570, %v571
      %v573 = vrot.slane %v444, 1
      %v574 = vsel %vm499, %v571, %v573
      %v575 = vrot.slane %v445, 1
      %v576 = vrot.slane %v446, 1
      %v577 = vsel %vm499, %v575, %v576
      %v578 = vrot.slane %v447, 1
      %v579 = vsel %vm499, %v576, %v578
      %580 = vrot.lane.b32.xlu0 %v502, 4
      %v581 = vpop.permute.xlu0 %580
      %582 = vrot.lane.b32.xlu0 %v504, 4
      %v583 = vpop.permute.xlu0 %582
      %584 = vrot.lane.b32.xlu0 %v507, 4
      %v585 = vpop.permute.xlu0 %584
      %586 = vrot.lane.b32.xlu0 %v509, 4
      %v587 = vpop.permute.xlu0 %586
      %588 = vrot.lane.b32.xlu0 %v512, 4
      %v589 = vpop.permute.xlu0 %588
      %590 = vrot.lane.b32.xlu0 %v514, 4
      %v591 = vpop.permute.xlu0 %590
      %592 = vrot.lane.b32.xlu0 %v517, 4
      %v593 = vpop.permute.xlu0 %592
      %594 = vrot.lane.b32.xlu0 %v519, 4
      %v595 = vpop.permute.xlu0 %594
      %596 = vrot.lane.b32.xlu0 %v522, 4
      %v597 = vpop.permute.xlu0 %596
      %598 = vrot.lane.b32.xlu0 %v524, 4
      %v599 = vpop.permute.xlu0 %598
      %600 = vrot.lane.b32.xlu0 %v527, 4
      %v601 = vpop.permute.xlu0 %600
      %602 = vrot.lane.b32.xlu0 %v529, 4
      %v603 = vpop.permute.xlu0 %602
      %604 = vrot.lane.b32.xlu0 %v532, 4
      %v605 = vpop.permute.xlu0 %604
      %606 = vrot.lane.b32.xlu0 %v534, 4
      %v607 = vpop.permute.xlu0 %606
      %608 = vrot.lane.b32.xlu0 %v537, 4
      %v609 = vpop.permute.xlu0 %608
      %610 = vrot.lane.b32.xlu0 %v539, 4
      %v611 = vpop.permute.xlu0 %610
      %612 = vrot.lane.b32.xlu0 %v542, 4
      %v613 = vpop.permute.xlu0 %612
      %614 = vrot.lane.b32.xlu0 %v544, 4
      %v615 = vpop.permute.xlu0 %614
      %616 = vrot.lane.b32.xlu0 %v547, 4
      %v617 = vpop.permute.xlu0 %616
      %618 = vrot.lane.b32.xlu0 %v549, 4
      %v619 = vpop.permute.xlu0 %618
      %620 = vrot.lane.b32.xlu0 %v552, 4
      %v621 = vpop.permute.xlu0 %620
      %622 = vrot.lane.b32.xlu0 %v554, 4
      %v623 = vpop.permute.xlu0 %622
      %624 = vrot.lane.b32.xlu0 %v557, 4
      %v625 = vpop.permute.xlu0 %624
      %626 = vrot.lane.b32.xlu0 %v559, 4
      %v627 = vpop.permute.xlu0 %626
      %628 = vrot.lane.b32.xlu0 %v562, 4
      %v629 = vpop.permute.xlu0 %628
      %630 = vrot.lane.b32.xlu0 %v564, 4
      %v631 = vpop.permute.xlu0 %630
      %632 = vrot.lane.b32.xlu0 %v567, 4
      %v633 = vpop.permute.xlu0 %632
      %634 = vrot.lane.b32.xlu0 %v569, 4
      %v635 = vpop.permute.xlu0 %634
      %636 = vrot.lane.b32.xlu0 %v572, 4
      %v637 = vpop.permute.xlu0 %636
      %638 = vrot.lane.b32.xlu0 %v574, 4
      %v639 = vpop.permute.xlu0 %638
      %640 = vrot.lane.b32.xlu0 %v577, 4
      %v641 = vpop.permute.xlu0 %640
      %642 = vrot.lane.b32.xlu0 %v579, 4
      %v643 = vpop.permute.xlu0 %642
      %678 = vrot.lane.b32.xlu0 %v403, 8
      %v679 = vpop.permute.xlu0 %678
      %680 = vrot.lane.b32.xlu0 %v404, 8
      %v681 = vpop.permute.xlu0 %680
      %682 = vrot.lane.b32.xlu0 %v406, 8
      %v683 = vpop.permute.xlu0 %682
      %684 = vrot.lane.b32.xlu0 %v407, 8
      %v685 = vpop.permute.xlu0 %684
      %686 = vrot.lane.b32.xlu0 %v409, 8
      %v687 = vpop.permute.xlu0 %686
      %688 = vrot.lane.b32.xlu0 %v410, 8
      %v689 = vpop.permute.xlu0 %688
      %690 = vrot.lane.b32.xlu0 %v412, 8
      %v691 = vpop.permute.xlu0 %690
      %692 = vrot.lane.b32.xlu0 %v413, 8
      %v693 = vpop.permute.xlu0 %692
      %694 = vrot.lane.b32.xlu0 %v415, 8
      %v695 = vpop.permute.xlu0 %694
      %696 = vrot.lane.b32.xlu0 %v416, 8
      %v697 = vpop.permute.xlu0 %696
      %698 = vrot.lane.b32.xlu0 %v418, 8
      %v699 = vpop.permute.xlu0 %698
      %700 = vrot.lane.b32.xlu0 %v419, 8
      %v701 = vpop.permute.xlu0 %700
      %702 = vrot.lane.b32.xlu0 %v421, 8
      %v703 = vpop.permute.xlu0 %702
      %704 = vrot.lane.b32.xlu0 %v422, 8
      %v705 = vpop.permute.xlu0 %704
      %706 = vrot.lane.b32.xlu0 %v424, 8
      %v707 = vpop.permute.xlu0 %706
      %708 = vrot.lane.b32.xlu0 %v425, 8
      %v709 = vpop.permute.xlu0 %708
      %710 = vrot.lane.b32.xlu0 %v427, 8
      %v711 = vpop.permute.xlu0 %710
      %712 = vrot.lane.b32.xlu0 %v428, 8
      %v713 = vpop.permute.xlu0 %712
      %714 = vrot.lane.b32.xlu0 %v430, 8
      %v715 = vpop.permute.xlu0 %714
      %716 = vrot.lane.b32.xlu0 %v431, 8
      %v717 = vpop.permute.xlu0 %716
      %718 = vrot.lane.b32.xlu0 %v433, 8
      %v719 = vpop.permute.xlu0 %718
      %720 = vrot.lane.b32.xlu0 %v434, 8
      %v721 = vpop.permute.xlu0 %720
      %722 = vrot.lane.b32.xlu0 %v436, 8
      %v723 = vpop.permute.xlu0 %722
      %724 = vrot.lane.b32.xlu0 %v437, 8
      %v725 = vpop.permute.xlu0 %724
      %726 = vrot.lane.b32.xlu0 %v439, 8
      %v727 = vpop.permute.xlu0 %726
      %728 = vrot.lane.b32.xlu0 %v440, 8
      %v729 = vpop.permute.xlu0 %728
      %730 = vrot.lane.b32.xlu0 %v442, 8
      %v731 = vpop.permute.xlu0 %730
      %732 = vrot.lane.b32.xlu0 %v443, 8
      %v733 = vpop.permute.xlu0 %732
      %734 = vrot.lane.b32.xlu0 %v445, 8
      %v735 = vpop.permute.xlu0 %734
      %736 = vrot.lane.b32.xlu0 %v446, 8
      %v737 = vpop.permute.xlu0 %736
      %738 = vrot.lane.b32.xlu0 %v448, 8
      %v739 = vpop.permute.xlu0 %738
      %740 = vrot.lane.b32.xlu0 %v449, 8
      %v741 = vpop.permute.xlu0 %740
      %v775 = vrot.slane %v448, 1
      %v776 = vrot.slane %v449, 1
      %v777 = vsel %vm499, %v775, %v776
      %v778 = vrot.slane %v450, 1
      %v779 = vsel %vm499, %v776, %v778
      %780 = vrot.lane.b32.xlu0 %v507, 12
      %v781 = vpop.permute.xlu0 %780
      %782 = vrot.lane.b32.xlu0 %v509, 12
      %v783 = vpop.permute.xlu0 %782
      %784 = vrot.lane.b32.xlu0 %v512, 12
      %v785 = vpop.permute.xlu0 %784
      %786 = vrot.lane.b32.xlu0 %v514, 12
      %v787 = vpop.permute.xlu0 %786
      %788 = vrot.lane.b32.xlu0 %v517, 12
      %v789 = vpop.permute.xlu0 %788
      %790 = vrot.lane.b32.xlu0 %v519, 12
      %v791 = vpop.permute.xlu0 %790
      %792 = vrot.lane.b32.xlu0 %v522, 12
      %v793 = vpop.permute.xlu0 %792
      %794 = vrot.lane.b32.xlu0 %v524, 12
      %v795 = vpop.permute.xlu0 %794
      %796 = vrot.lane.b32.xlu0 %v527, 12
      %v797 = vpop.permute.xlu0 %796
      %798 = vrot.lane.b32.xlu0 %v529, 12
      %v799 = vpop.permute.xlu0 %798
      %800 = vrot.lane.b32.xlu0 %v532, 12
      %v801 = vpop.permute.xlu0 %800
      %802 = vrot.lane.b32.xlu0 %v534, 12
      %v803 = vpop.permute.xlu0 %802
      %804 = vrot.lane.b32.xlu0 %v537, 12
      %v805 = vpop.permute.xlu0 %804
      %806 = vrot.lane.b32.xlu0 %v539, 12
      %v807 = vpop.permute.xlu0 %806
      %808 = vrot.lane.b32.xlu0 %v542, 12
      %v809 = vpop.permute.xlu0 %808
      %810 = vrot.lane.b32.xlu0 %v544, 12
      %v811 = vpop.permute.xlu0 %810
      %812 = vrot.lane.b32.xlu0 %v547, 12
      %v813 = vpop.permute.xlu0 %812
      %814 = vrot.lane.b32.xlu0 %v549, 12
      %v815 = vpop.permute.xlu0 %814
      %816 = vrot.lane.b32.xlu0 %v552, 12
      %v817 = vpop.permute.xlu0 %816
      %818 = vrot.lane.b32.xlu0 %v554, 12
      %v819 = vpop.permute.xlu0 %818
      %820 = vrot.lane.b32.xlu0 %v557, 12
      %v821 = vpop.permute.xlu0 %820
      %822 = vrot.lane.b32.xlu0 %v559, 12
      %v823 = vpop.permute.xlu0 %822
      %824 = vrot.lane.b32.xlu0 %v562, 12
      %v825 = vpop.permute.xlu0 %824
      %826 = vrot.lane.b32.xlu0 %v564, 12
      %v827 = vpop.permute.xlu0 %826
      %828 = vrot.lane.b32.xlu0 %v567, 12
      %v829 = vpop.permute.xlu0 %828
      %830 = vrot.lane.b32.xlu0 %v569, 12
      %v831 = vpop.permute.xlu0 %830
      %832 = vrot.lane.b32.xlu0 %v572, 12
      %v833 = vpop.permute.xlu0 %832
      %834 = vrot.lane.b32.xlu0 %v574, 12
      %v835 = vpop.permute.xlu0 %834
      %836 = vrot.lane.b32.xlu0 %v577, 12
      %v837 = vpop.permute.xlu0 %836
      %838 = vrot.lane.b32.xlu0 %v579, 12
      %v839 = vpop.permute.xlu0 %838
      %840 = vrot.lane.b32.xlu0 %v777, 12
      %v841 = vpop.permute.xlu0 %840
      %842 = vrot.lane.b32.xlu0 %v779, 12
      %v843 = vpop.permute.xlu0 %842
      %vm876 = vcmask 31744
      %v877 = vsel %vm876, %v400, %v581
      %v878 = vsel %vm876, %v401, %v583
      %v879 = vsel %vm876, %v403, %v585
      %v880 = vsel %vm876, %v404, %v587
      %v881 = vsel %vm876, %v406, %v589
      %v882 = vsel %vm876, %v407, %v591
      %v883 = vsel %vm876, %v409, %v593
      %v884 = vsel %vm876, %v410, %v595
      %v885 = vsel %vm876, %v412, %v597
      %v886 = vsel %vm876, %v413, %v599
      %v887 = vsel %vm876, %v415, %v601
      %v888 = vsel %vm876, %v416, %v603
      %v889 = vsel %vm876, %v418, %v605
      %v890 = vsel %vm876, %v419, %v607
      %v891 = vsel %vm876, %v421, %v609
      %v892 = vsel %vm876, %v422, %v611
      %v893 = vsel %vm876, %v424, %v613
      %v894 = vsel %vm876, %v425, %v615
      %v895 = vsel %vm876, %v427, %v617
      %v896 = vsel %vm876, %v428, %v619
      %v897 = vsel %vm876, %v430, %v621
      %v898 = vsel %vm876, %v431, %v623
      %v899 = vsel %vm876, %v433, %v625
      %v900 = vsel %vm876, %v434, %v627
      %v901 = vsel %vm876, %v436, %v629
      %v902 = vsel %vm876, %v437, %v631
      %v903 = vsel %vm876, %v439, %v633
      %v904 = vsel %vm876, %v440, %v635
      %v905 = vsel %vm876, %v442, %v637
      %v906 = vsel %vm876, %v443, %v639
      %v907 = vsel %vm876, %v445, %v641
      %v908 = vsel %vm876, %v446, %v643
      %vm909 = vcmask 64512
      %v910 = vsel %vm909, %v877, %v679
      %v911 = vsel %vm909, %v878, %v681
      %v912 = vsel %vm909, %v879, %v683
      %v913 = vsel %vm909, %v880, %v685
      %v914 = vsel %vm909, %v881, %v687
      %v915 = vsel %vm909, %v882, %v689
      %v916 = vsel %vm909, %v883, %v691
      %v917 = vsel %vm909, %v884, %v693
      %v918 = vsel %vm909, %v885, %v695
      %v919 = vsel %vm909, %v886, %v697
      %v920 = vsel %vm909, %v887, %v699
      %v921 = vsel %vm909, %v888, %v701
      %v922 = vsel %vm909, %v889, %v703
      %v923 = vsel %vm909, %v890, %v705
      %v924 = vsel %vm909, %v891, %v707
      %v925 = vsel %vm909, %v892, %v709
      %v926 = vsel %vm909, %v893, %v711
      %v927 = vsel %vm909, %v894, %v713
      %v928 = vsel %vm909, %v895, %v715
      %v929 = vsel %vm909, %v896, %v717
      %v930 = vsel %vm909, %v897, %v719
      %v931 = vsel %vm909, %v898, %v721
      %v932 = vsel %vm909, %v899, %v723
      %v933 = vsel %vm909, %v900, %v725
      %v934 = vsel %vm909, %v901, %v727
      %v935 = vsel %vm909, %v902, %v729
      %v936 = vsel %vm909, %v903, %v731
      %v937 = vsel %vm909, %v904, %v733
      %v938 = vsel %vm909, %v905, %v735
      %v939 = vsel %vm909, %v906, %v737
      %v940 = vsel %vm909, %v907, %v739
      %v941 = vsel %vm909, %v908, %v741
      %vm942 = vcmask 97280
      %v943 = vsel %vm942, %v910, %v781
      %v944 = vsel %vm942, %v911, %v783
      %v945 = vsel %vm942, %v912, %v785
      %v946 = vsel %vm942, %v913, %v787
      %v947 = vsel %vm942, %v914, %v789
      %v948 = vsel %vm942, %v915, %v791
      %v949 = vsel %vm942, %v916, %v793
      %v950 = vsel %vm942, %v917, %v795
      %v951 = vsel %vm942, %v918, %v797
      %v952 = vsel %vm942, %v919, %v799
      %v953 = vsel %vm942, %v920, %v801
      %v954 = vsel %vm942, %v921, %v803
      %v955 = vsel %vm942, %v922, %v805
      %v956 = vsel %vm942, %v923, %v807
      %v957 = vsel %vm942, %v924, %v809
      %v958 = vsel %vm942, %v925, %v811
      %v959 = vsel %vm942, %v926, %v813
      %v960 = vsel %vm942, %v927, %v815
      %v961 = vsel %vm942, %v928, %v817
      %v962 = vsel %vm942, %v929, %v819
      %v963 = vsel %vm942, %v930, %v821
      %v964 = vsel %vm942, %v931, %v823
      %v965 = vsel %vm942, %v932, %v825
      %v966 = vsel %vm942, %v933, %v827
      %v967 = vsel %vm942, %v934, %v829
      %v968 = vsel %vm942, %v935, %v831
      %v969 = vsel %vm942, %v936, %v833
      %v970 = vsel %vm942, %v937, %v835
      %v971 = vsel %vm942, %v938, %v837
      %v972 = vsel %vm942, %v939, %v839
      %v973 = vsel %vm942, %v940, %v841
      %v974 = vsel %vm942, %v941, %v843
      %v975 = vld [vmem:[%s2] sm:$0xff]
      %v976 = vld [vmem:[%s2 + $0x8] sm:$0xff]
      %vm977 = vcmask 130048
      %v979 = vsel %vm977, %v943, 0
      %v982 = vsel %vm977, %v944, 0
      %v985 = vsel %vm977, %v945, 0
      %v988 = vsel %vm977, %v946, 0
      %v991 = vsel %vm977, %v947, 0
      %v994 = vsel %vm977, %v948, 0
      %v997 = vsel %vm977, %v949, 0
      %v1000 = vsel %vm977, %v950, 0
      %v1003 = vsel %vm977, %v951, 0
      %v1006 = vsel %vm977, %v952, 0
      %v1009 = vsel %vm977, %v953, 0
      %v1012 = vsel %vm977, %v954, 0
      %v1015 = vsel %vm977, %v955, 0
      %v1018 = vsel %vm977, %v956, 0
      %v1021 = vsel %vm977, %v957, 0
      %v1024 = vsel %vm977, %v958, 0
      %v1027 = vsel %vm977, %v959, 0
      %v1030 = vsel %vm977, %v960, 0
      %v1033 = vsel %vm977, %v961, 0
      %v1036 = vsel %vm977, %v962, 0
      %v1039 = vsel %vm977, %v963, 0
      %v1042 = vsel %vm977, %v964, 0
      %v1045 = vsel %vm977, %v965, 0
      %v1048 = vsel %vm977, %v966, 0
      %v1051 = vsel %vm977, %v967, 0
      %v1054 = vsel %vm977, %v968, 0
      %v1057 = vsel %vm977, %v969, 0
      %v1060 = vsel %vm977, %v970, 0
      %v1063 = vsel %vm977, %v971, 0
      %v1066 = vsel %vm977, %v972, 0
      %v1069 = vsel %vm977, %v973, 0
      %v1072 = vsel %vm977, %v974, 0
      %1074 = vmatprep.subr.mxu0 0.0
      %1075 = vmatpush1.msra.mxu0 %v975
      %1076 = vmatprep.subr.mxu0 0.0
      %1077 = vmatpush1.msra.mxu0 %v976
      %1078 = vmatprep.subr.mxu0 0.0
      %1079 = vmatpush1.msra.mxu0 0.0
      %1080 = vmatprep.subr.mxu0 0.0
      %1081 = vmatpush1.msra.mxu0 0.0
      %1082 = vmatprep.subr.mxu0 0.0
      %1083 = vmatpush1.msra.mxu0 0.0
      %1084 = vmatprep.subr.mxu0 0.0
      %1085 = vmatpush1.msra.mxu0 0.0
      %1086 = vmatprep.subr.mxu0 0.0
      %1087 = vmatpush1.msra.mxu0 0.0
      %1088 = vmatprep.subr.mxu0 0.0
      %1089 = vmatpush1.msra.mxu0 0.0
      %1090 = vmatprep.subr.mxu0 0.0
      %1091 = vmatpush1.msra.mxu0 0.0
      %1092 = vmatprep.subr.mxu0 0.0
      %1093 = vmatpush1.msra.mxu0 0.0
      %1094 = vmatprep.subr.mxu0 0.0
      %1095 = vmatpush1.msra.mxu0 0.0
      %1096 = vmatprep.subr.mxu0 0.0
      %1097 = vmatpush1.msra.mxu0 0.0
      %1098 = vmatprep.subr.mxu0 0.0
      %1099 = vmatpush1.msra.mxu0 0.0
      %1100 = vmatprep.subr.mxu0 0.0
      %1101 = vmatpush1.msra.mxu0 0.0
      %1102 = vmatprep.subr.mxu0 0.0
      %1103 = vmatpush1.msra.mxu0 0.0
      %1104 = vmatprep.subr.mxu0 0.0
      %1105 = vmatpush1.msra.mxu0 0.0
      %1106 = vmatprep.subr.mxu0 0.0
      %1107 = vmatpush1.msra.mxu0 0.0
      %1108 = vmatprep.subr.mxu0 0.0
      %1109 = vmatpush1.msra.mxu0 0.0
      %1110 = vmatprep.subr.mxu0 0.0
      %1111 = vmatpush1.msra.mxu0 0.0
      %1112 = vmatprep.subr.mxu0 0.0
      %1113 = vmatpush1.msra.mxu0 0.0
      %1114 = vmatprep.subr.mxu0 0.0
      %1115 = vmatpush1.msra.mxu0 0.0
      %1116 = vmatprep.subr.mxu0 0.0
      %1117 = vmatpush1.msra.mxu0 0.0
      %1118 = vmatprep.subr.mxu0 0.0
      %1119 = vmatpush1.msra.mxu0 0.0
      %1120 = vmatprep.subr.mxu0 0.0
      %1121 = vmatpush1.msra.mxu0 0.0
      %1122 = vmatprep.subr.mxu0 0.0
      %1123 = vmatpush1.msra.mxu0 0.0
      %1124 = vmatprep.subr.mxu0 0.0
      %1125 = vmatpush1.msra.mxu0 0.0
      %1126 = vmatprep.subr.mxu0 0.0
      %1127 = vmatpush1.msra.mxu0 0.0
      %1128 = vmatprep.subr.mxu0 0.0
      %1129 = vmatpush1.msra.mxu0 0.0
      %1130 = vmatprep.subr.mxu0 0.0
      %1131 = vmatpush1.msra.mxu0 0.0
      %1132 = vmatprep.subr.mxu0 0.0
      %1133 = vmatpush1.msra.mxu0 0.0
      %1134 = vmatprep.subr.mxu0 0.0
      %1135 = vmatpush1.msra.mxu0 0.0
      %1136 = vmatprep.subr.mxu0 0.0
      %1137 = vmatpush1.msra.mxu0 0.0
      %1138 = vmatprep.mubr.f32.mxu0 0.0
      %1139 = vmatmul.mubr.f32.gmra.mrb[0].mxu0 %v979
      %v1140 = vpop.f32.mrb[0].mxu0
      %v1141 = vadd.f32 0.0, %v1140
      %v1142 = vpop.f32.mrb[0].mxu0
      %1143 = vmatprep.mubr.f32.mxu0 0.0
      %1144 = vmatmul.mubr.f32.gmra.mrb[0].mxu0 %v982
      %v1145 = vpop.f32.mrb[0].mxu0
      %v1146 = vadd.f32 0.0, %v1145
      %v1147 = vpop.f32.mrb[0].mxu0
      %1148 = vmatprep.mubr.f32.mxu0 0.0
      %1149 = vmatmul.mubr.f32.gmra.mrb[0].mxu0 %v985
      %v1150 = vpop.f32.mrb[0].mxu0
      %v1151 = vadd.f32 0.0, %v1150
      %v1152 = vpop.f32.mrb[0].mxu0
      %1153 = vmatprep.mubr.f32.mxu0 0.0
      %1154 = vmatmul.mubr.f32.gmra.mrb[0].mxu0 %v988
      %v1155 = vpop.f32.mrb[0].mxu0
      %v1156 = vadd.f32 0.0, %v1155
      %v1157 = vpop.f32.mrb[0].mxu0
      %1158 = vmatprep.mubr.f32.mxu0 0.0
      %1159 = vmatmul.mubr.f32.gmra.mrb[0].mxu0 %v991
      %v1160 = vpop.f32.mrb[0].mxu0
      %v1161 = vadd.f32 0.0, %v1160
      %v1162 = vpop.f32.mrb[0].mxu0
      %1163 = vmatprep.mubr.f32.mxu0 0.0
      %1164 = vmatmul.mubr.f32.gmra.mrb[0].mxu0 %v994
      %v1165 = vpop.f32.mrb[0].mxu0
      %v1166 = vadd.f32 0.0, %v1165
      %v1167 = vpop.f32.mrb[0].mxu0
      %1168 = vmatprep.mubr.f32.mxu0 0.0
      %1169 = vmatmul.mubr.f32.gmra.mrb[0].mxu0 %v997
      %v1170 = vpop.f32.mrb[0].mxu0
      %v1171 = vadd.f32 0.0, %v1170
      %v1172 = vpop.f32.mrb[0].mxu0
      %1173 = vmatprep.mubr.f32.mxu0 0.0
      %1174 = vmatmul.mubr.f32.gmra.mrb[0].mxu0 %v1000
      %v1175 = vpop.f32.mrb[0].mxu0
      %v1176 = vadd.f32 0.0, %v1175
      %v1177 = vpop.f32.mrb[0].mxu0
      %1178 = vmatprep.mubr.f32.mxu0 0.0
      %1179 = vmatmul.mubr.f32.gmra.mrb[0].mxu0 %v1003
      %v1180 = vpop.f32.mrb[0].mxu0
      %v1181 = vadd.f32 0.0, %v1180
      %v1182 = vpop.f32.mrb[0].mxu0
      %1183 = vmatprep.mubr.f32.mxu0 0.0
      %1184 = vmatmul.mubr.f32.gmra.mrb[0].mxu0 %v1006
      %v1185 = vpop.f32.mrb[0].mxu0
      %v1186 = vadd.f32 0.0, %v1185
      %v1187 = vpop.f32.mrb[0].mxu0
      %1188 = vmatprep.mubr.f32.mxu0 0.0
      %1189 = vmatmul.mubr.f32.gmra.mrb[0].mxu0 %v1009
      %v1190 = vpop.f32.mrb[0].mxu0
      %v1191 = vadd.f32 0.0, %v1190
      %v1192 = vpop.f32.mrb[0].mxu0
      %1193 = vmatprep.mubr.f32.mxu0 0.0
      %1194 = vmatmul.mubr.f32.gmra.mrb[0].mxu0 %v1012
      %v1195 = vpop.f32.mrb[0].mxu0
      %v1196 = vadd.f32 0.0, %v1195
      %v1197 = vpop.f32.mrb[0].mxu0
      %1198 = vmatprep.mubr.f32.mxu0 0.0
      %1199 = vmatmul.mubr.f32.gmra.mrb[0].mxu0 %v1015
      %v1200 = vpop.f32.mrb[0].mxu0
      %v1201 = vadd.f32 0.0, %v1200
      %v1202 = vpop.f32.mrb[0].mxu0
      %1203 = vmatprep.mubr.f32.mxu0 0.0
      %1204 = vmatmul.mubr.f32.gmra.mrb[0].mxu0 %v1018
      %v1205 = vpop.f32.mrb[0].mxu0
      %v1206 = vadd.f32 0.0, %v1205
      %v1207 = vpop.f32.mrb[0].mxu0
      %1208 = vmatprep.mubr.f32.mxu0 0.0
      %1209 = vmatmul.mubr.f32.gmra.mrb[0].mxu0 %v1021
      %v1210 = vpop.f32.mrb[0].mxu0
      %v1211 = vadd.f32 0.0, %v1210
      %v1212 = vpop.f32.mrb[0].mxu0
      %1213 = vmatprep.mubr.f32.mxu0 0.0
      %1214 = vmatmul.mubr.f32.gmra.mrb[0].mxu0 %v1024
      %v1215 = vpop.f32.mrb[0].mxu0
      %v1216 = vadd.f32 0.0, %v1215
      %v1217 = vpop.f32.mrb[0].mxu0
      %1218 = vmatprep.mubr.f32.mxu0 0.0
      %1219 = vmatmul.mubr.f32.gmra.mrb[0].mxu0 %v1027
      %v1220 = vpop.f32.mrb[0].mxu0
      %v1221 = vadd.f32 0.0, %v1220
      %v1222 = vpop.f32.mrb[0].mxu0
      %1223 = vmatprep.mubr.f32.mxu0 0.0
      %1224 = vmatmul.mubr.f32.gmra.mrb[0].mxu0 %v1030
      %v1225 = vpop.f32.mrb[0].mxu0
      %v1226 = vadd.f32 0.0, %v1225
      %v1227 = vpop.f32.mrb[0].mxu0
      %1228 = vmatprep.mubr.f32.mxu0 0.0
      %1229 = vmatmul.mubr.f32.gmra.mrb[0].mxu0 %v1033
      %v1230 = vpop.f32.mrb[0].mxu0
      %v1231 = vadd.f32 0.0, %v1230
      %v1232 = vpop.f32.mrb[0].mxu0
      %1233 = vmatprep.mubr.f32.mxu0 0.0
      %1234 = vmatmul.mubr.f32.gmra.mrb[0].mxu0 %v1036
      %v1235 = vpop.f32.mrb[0].mxu0
      %v1236 = vadd.f32 0.0, %v1235
      %v1237 = vpop.f32.mrb[0].mxu0
      %1238 = vmatprep.mubr.f32.mxu0 0.0
      %1239 = vmatmul.mubr.f32.gmra.mrb[0].mxu0 %v1039
      %v1240 = vpop.f32.mrb[0].mxu0
      %v1241 = vadd.f32 0.0, %v1240
      %v1242 = vpop.f32.mrb[0].mxu0
      %1243 = vmatprep.mubr.f32.mxu0 0.0
      %1244 = vmatmul.mubr.f32.gmra.mrb[0].mxu0 %v1042
      %v1245 = vpop.f32.mrb[0].mxu0
      %v1246 = vadd.f32 0.0, %v1245
      %v1247 = vpop.f32.mrb[0].mxu0
      %1248 = vmatprep.mubr.f32.mxu0 0.0
      %1249 = vmatmul.mubr.f32.gmra.mrb[0].mxu0 %v1045
      %v1250 = vpop.f32.mrb[0].mxu0
      %v1251 = vadd.f32 0.0, %v1250
      %v1252 = vpop.f32.mrb[0].mxu0
      %1253 = vmatprep.mubr.f32.mxu0 0.0
      %1254 = vmatmul.mubr.f32.gmra.mrb[0].mxu0 %v1048
      %v1255 = vpop.f32.mrb[0].mxu0
      %v1256 = vadd.f32 0.0, %v1255
      %v1257 = vpop.f32.mrb[0].mxu0
      %1258 = vmatprep.mubr.f32.mxu0 0.0
      %1259 = vmatmul.mubr.f32.gmra.mrb[0].mxu0 %v1051
      %v1260 = vpop.f32.mrb[0].mxu0
      %v1261 = vadd.f32 0.0, %v1260
      %v1262 = vpop.f32.mrb[0].mxu0
      %1263 = vmatprep.mubr.f32.mxu0 0.0
      %1264 = vmatmul.mubr.f32.gmra.mrb[0].mxu0 %v1054
      %v1265 = vpop.f32.mrb[0].mxu0
      %v1266 = vadd.f32 0.0, %v1265
      %v1267 = vpop.f32.mrb[0].mxu0
      %1268 = vmatprep.mubr.f32.mxu0 0.0
      %1269 = vmatmul.mubr.f32.gmra.mrb[0].mxu0 %v1057
      %v1270 = vpop.f32.mrb[0].mxu0
      %v1271 = vadd.f32 0.0, %v1270
      %v1272 = vpop.f32.mrb[0].mxu0
      %1273 = vmatprep.mubr.f32.mxu0 0.0
      %1274 = vmatmul.mubr.f32.gmra.mrb[0].mxu0 %v1060
      %v1275 = vpop.f32.mrb[0].mxu0
      %v1276 = vadd.f32 0.0, %v1275
      %v1277 = vpop.f32.mrb[0].mxu0
      %1278 = vmatprep.mubr.f32.mxu0 0.0
      %1279 = vmatmul.mubr.f32.gmra.mrb[0].mxu0 %v1063
      %v1280 = vpop.f32.mrb[0].mxu0
      %v1281 = vadd.f32 0.0, %v1280
      %v1282 = vpop.f32.mrb[0].mxu0
      %1283 = vmatprep.mubr.f32.mxu0 0.0
      %1284 = vmatmul.mubr.f32.gmra.mrb[0].mxu0 %v1066
      %v1285 = vpop.f32.mrb[0].mxu0
      %v1286 = vadd.f32 0.0, %v1285
      %v1287 = vpop.f32.mrb[0].mxu0
      %1288 = vmatprep.mubr.f32.mxu0 0.0
      %1289 = vmatmul.mubr.f32.gmra.mrb[0].mxu0 %v1069
      %v1290 = vpop.f32.mrb[0].mxu0
      %v1291 = vadd.f32 0.0, %v1290
      %v1292 = vpop.f32.mrb[0].mxu0
      %1293 = vmatprep.mubr.f32.mxu0 0.0
      %1294 = vmatmul.mubr.f32.gmra.mrb[0].mxu0 %v1072
      %v1295 = vpop.f32.mrb[0].mxu0
      %v1296 = vadd.f32 0.0, %v1295
      %v1297 = vpop.f32.mrb[0].mxu0
      %1298 = vdwg.mxu0
      %vm1299 = vcmask 261120
      %v1300 = vsel %vm1299, %v1141, 0.0
      %v1301 = vsel %vm1299, %v1146, 0.0
      %v1302 = vadd.f32 %v1300, %v1301
      %v1303 = vsel %vm1299, %v1151, 0.0
      %v1304 = vadd.f32 %v1302, %v1303
      %v1305 = vsel %vm1299, %v1156, 0.0
      %v1306 = vadd.f32 %v1304, %v1305
      %v1307 = vsel %vm1299, %v1161, 0.0
      %v1308 = vadd.f32 %v1306, %v1307
      %v1309 = vsel %vm1299, %v1166, 0.0
      %v1310 = vadd.f32 %v1308, %v1309
      %v1311 = vsel %vm1299, %v1171, 0.0
      %v1312 = vadd.f32 %v1310, %v1311
      %v1313 = vsel %vm1299, %v1176, 0.0
      %v1314 = vadd.f32 %v1312, %v1313
      %v1315 = vsel %vm1299, %v1181, 0.0
      %v1316 = vadd.f32 %v1314, %v1315
      %v1317 = vsel %vm1299, %v1186, 0.0
      %v1318 = vadd.f32 %v1316, %v1317
      %v1319 = vsel %vm1299, %v1191, 0.0
      %v1320 = vadd.f32 %v1318, %v1319
      %v1321 = vsel %vm1299, %v1196, 0.0
      %v1322 = vadd.f32 %v1320, %v1321
      %v1323 = vsel %vm1299, %v1201, 0.0
      %v1324 = vadd.f32 %v1322, %v1323
      %v1325 = vsel %vm1299, %v1206, 0.0
      %v1326 = vadd.f32 %v1324, %v1325
      %v1327 = vsel %vm1299, %v1211, 0.0
      %v1328 = vadd.f32 %v1326, %v1327
      %v1329 = vsel %vm1299, %v1216, 0.0
      %v1330 = vadd.f32 %v1328, %v1329
      %v1331 = vsel %vm1299, %v1221, 0.0
      %v1332 = vadd.f32 %v1330, %v1331
      %v1333 = vsel %vm1299, %v1226, 0.0
      %v1334 = vadd.f32 %v1332, %v1333
      %v1335 = vsel %vm1299, %v1231, 0.0
      %v1336 = vadd.f32 %v1334, %v1335
      %v1337 = vsel %vm1299, %v1236, 0.0
      %v1338 = vadd.f32 %v1336, %v1337
      %v1339 = vsel %vm1299, %v1241, 0.0
      %v1340 = vadd.f32 %v1338, %v1339
      %v1341 = vsel %vm1299, %v1246, 0.0
      %v1342 = vadd.f32 %v1340, %v1341
      %v1343 = vsel %vm1299, %v1251, 0.0
      %v1344 = vadd.f32 %v1342, %v1343
      %v1345 = vsel %vm1299, %v1256, 0.0
      %v1346 = vadd.f32 %v1344, %v1345
      %v1347 = vsel %vm1299, %v1261, 0.0
      %v1348 = vadd.f32 %v1346, %v1347
      %v1349 = vsel %vm1299, %v1266, 0.0
      %v1350 = vadd.f32 %v1348, %v1349
      %v1351 = vsel %vm1299, %v1271, 0.0
      %v1352 = vadd.f32 %v1350, %v1351
      %v1353 = vsel %vm1299, %v1276, 0.0
      %v1354 = vadd.f32 %v1352, %v1353
      %v1355 = vsel %vm1299, %v1281, 0.0
      %v1356 = vadd.f32 %v1354, %v1355
      %v1357 = vsel %vm1299, %v1286, 0.0
      %v1358 = vadd.f32 %v1356, %v1357
      %v1359 = vsel %vm1299, %v1291, 0.0
      %v1360 = vadd.f32 %v1358, %v1359
      %v1361 = vsel %vm1299, %v1296, 0.0
      %v1362 = vadd.f32 %v1360, %v1361
      %v1363 = vrot.slane %v1362, 4
      %v1364 = vadd.f32 %v1362, %v1363
      %v1365 = vrot.slane %v1364, 2
      %v1366 = vadd.f32 %v1364, %v1365
      %v1367 = vrot.slane %v1366, 1
      %v1368 = vadd.f32 %v1366, %v1367
      %vm1369 = vcmask 253952
      %1370 = vst.msk [vmem:[%s393] sm:$0x1] %vm1369, %v1368
      %v1371 = vmul.f32 %v1141, %v1141
      %v1372 = vmul.f32 %v1146, %v1146
      %v1373 = vmul.f32 %v1151, %v1151
      %v1374 = vmul.f32 %v1156, %v1156
      %v1375 = vmul.f32 %v1161, %v1161
      %v1376 = vmul.f32 %v1166, %v1166
      %v1377 = vmul.f32 %v1171, %v1171
      %v1378 = vmul.f32 %v1176, %v1176
      %v1379 = vmul.f32 %v1181, %v1181
      %v1380 = vmul.f32 %v1186, %v1186
      %v1381 = vmul.f32 %v1191, %v1191
      %v1382 = vmul.f32 %v1196, %v1196
      %v1383 = vmul.f32 %v1201, %v1201
      %v1384 = vmul.f32 %v1206, %v1206
      %v1385 = vmul.f32 %v1211, %v1211
      %v1386 = vmul.f32 %v1216, %v1216
      %v1387 = vmul.f32 %v1221, %v1221
      %v1388 = vmul.f32 %v1226, %v1226
      %v1389 = vmul.f32 %v1231, %v1231
      %v1390 = vmul.f32 %v1236, %v1236
      %v1391 = vmul.f32 %v1241, %v1241
      %v1392 = vmul.f32 %v1246, %v1246
      %v1393 = vmul.f32 %v1251, %v1251
      %v1394 = vmul.f32 %v1256, %v1256
      %v1395 = vmul.f32 %v1261, %v1261
      %v1396 = vmul.f32 %v1266, %v1266
      %v1397 = vmul.f32 %v1271, %v1271
      %v1398 = vmul.f32 %v1276, %v1276
      %v1399 = vmul.f32 %v1281, %v1281
      %v1400 = vmul.f32 %v1286, %v1286
      %v1401 = vmul.f32 %v1291, %v1291
      %v1402 = vmul.f32 %v1296, %v1296
      %v1403 = vsel %vm1299, %v1371, 0.0
      %v1404 = vsel %vm1299, %v1372, 0.0
      %v1405 = vadd.f32 %v1403, %v1404
      %v1406 = vsel %vm1299, %v1373, 0.0
      %v1407 = vadd.f32 %v1405, %v1406
      %v1408 = vsel %vm1299, %v1374, 0.0
      %v1409 = vadd.f32 %v1407, %v1408
      %v1410 = vsel %vm1299, %v1375, 0.0
      %v1411 = vadd.f32 %v1409, %v1410
      %v1412 = vsel %vm1299, %v1376, 0.0
      %v1413 = vadd.f32 %v1411, %v1412
      %v1414 = vsel %vm1299, %v1377, 0.0
      %v1415 = vadd.f32 %v1413, %v1414
      %v1416 = vsel %vm1299, %v1378, 0.0
      %v1417 = vadd.f32 %v1415, %v1416
      %v1418 = vsel %vm1299, %v1379, 0.0
      %v1419 = vadd.f32 %v1417, %v1418
      %v1420 = vsel %vm1299, %v1380, 0.0
      %v1421 = vadd.f32 %v1419, %v1420
      %v1422 = vsel %vm1299, %v1381, 0.0
      %v1423 = vadd.f32 %v1421, %v1422
      %v1424 = vsel %vm1299, %v1382, 0.0
      %v1425 = vadd.f32 %v1423, %v1424
      %v1426 = vsel %vm1299, %v1383, 0.0
      %v1427 = vadd.f32 %v1425, %v1426
      %v1428 = vsel %vm1299, %v1384, 0.0
      %v1429 = vadd.f32 %v1427, %v1428
      %v1430 = vsel %vm1299, %v1385, 0.0
      %v1431 = vadd.f32 %v1429, %v1430
      %v1432 = vsel %vm1299, %v1386, 0.0
      %v1433 = vadd.f32 %v1431, %v1432
      %v1434 = vsel %vm1299, %v1387, 0.0
      %v1435 = vadd.f32 %v1433, %v1434
      %v1436 = vsel %vm1299, %v1388, 0.0
      %v1437 = vadd.f32 %v1435, %v1436
      %v1438 = vsel %vm1299, %v1389, 0.0
      %v1439 = vadd.f32 %v1437, %v1438
      %v1440 = vsel %vm1299, %v1390, 0.0
      %v1441 = vadd.f32 %v1439, %v1440
      %v1442 = vsel %vm1299, %v1391, 0.0
      %v1443 = vadd.f32 %v1441, %v1442
      %v1444 = vsel %vm1299, %v1392, 0.0
      %v1445 = vadd.f32 %v1443, %v1444
      %v1446 = vsel %vm1299, %v1393, 0.0
      %v1447 = vadd.f32 %v1445, %v1446
      %v1448 = vsel %vm1299, %v1394, 0.0
      %v1449 = vadd.f32 %v1447, %v1448
      %v1450 = vsel %vm1299, %v1395, 0.0
      %v1451 = vadd.f32 %v1449, %v1450
      %v1452 = vsel %vm1299, %v1396, 0.0
      %v1453 = vadd.f32 %v1451, %v1452
      %v1454 = vsel %vm1299, %v1397, 0.0
      %v1455 = vadd.f32 %v1453, %v1454
      %v1456 = vsel %vm1299, %v1398, 0.0
      %v1457 = vadd.f32 %v1455, %v1456
      %v1458 = vsel %vm1299, %v1399, 0.0
      %v1459 = vadd.f32 %v1457, %v1458
      %v1460 = vsel %vm1299, %v1400, 0.0
      %v1461 = vadd.f32 %v1459, %v1460
      %v1462 = vsel %vm1299, %v1401, 0.0
      %v1463 = vadd.f32 %v1461, %v1462
      %v1464 = vsel %vm1299, %v1402, 0.0
      %v1465 = vadd.f32 %v1463, %v1464
      %v1466 = vrot.slane %v1465, 4
      %v1467 = vadd.f32 %v1465, %v1466
      %v1468 = vrot.slane %v1467, 2
      %v1469 = vadd.f32 %v1467, %v1468
      %v1470 = vrot.slane %v1469, 1
      %v1471 = vadd.f32 %v1469, %v1470
      %1472 = vst.msk [vmem:[%s399] sm:$0x1] %vm1369, %v1471
      %v1473 = vld [vmem:[%s3] sm:$0x1]
      %v1475 = vlaneseq
      %v1476 = vshrl.u32 %v1475, 7
      %v1477 = vsub.s32 0, %v1476
      %v1478 = vrot.slane %v1473, %v1477
      %v1480 = vadd.f32 %v1141, %v1478
      %v1481 = vadd.f32 %v1146, %v1478
      %v1482 = vadd.f32 %v1151, %v1478
      %v1483 = vadd.f32 %v1156, %v1478
      %v1484 = vadd.f32 %v1161, %v1478
      %v1485 = vadd.f32 %v1166, %v1478
      %v1486 = vadd.f32 %v1171, %v1478
      %v1487 = vadd.f32 %v1176, %v1478
      %v1488 = vadd.f32 %v1181, %v1478
      %v1489 = vadd.f32 %v1186, %v1478
      %v1490 = vadd.f32 %v1191, %v1478
      %v1491 = vadd.f32 %v1196, %v1478
      %v1492 = vadd.f32 %v1201, %v1478
      %v1493 = vadd.f32 %v1206, %v1478
      %v1494 = vadd.f32 %v1211, %v1478
      %v1495 = vadd.f32 %v1216, %v1478
      %v1496 = vadd.f32 %v1221, %v1478
      %v1497 = vadd.f32 %v1226, %v1478
      %v1498 = vadd.f32 %v1231, %v1478
      %v1499 = vadd.f32 %v1236, %v1478
      %v1500 = vadd.f32 %v1241, %v1478
      %v1501 = vadd.f32 %v1246, %v1478
      %v1502 = vadd.f32 %v1251, %v1478
      %v1503 = vadd.f32 %v1256, %v1478
      %v1504 = vadd.f32 %v1261, %v1478
      %v1505 = vadd.f32 %v1266, %v1478
      %v1506 = vadd.f32 %v1271, %v1478
      %v1507 = vadd.f32 %v1276, %v1478
      %v1508 = vadd.f32 %v1281, %v1478
      %v1509 = vadd.f32 %v1286, %v1478
      %v1510 = vadd.f32 %v1291, %v1478
      %v1511 = vadd.f32 %v1296, %v1478
      %1512 = vxpose.xlu0.b32.start [1/16] %v1480, 128
      %1513 = vxpose.xlu0.b32.cont [2/16] %v1481, 128
      %1514 = vxpose.xlu0.b32.cont [3/16] %v1482, 128
      %1515 = vxpose.xlu0.b32.cont [4/16] %v1483, 128
      %1516 = vxpose.xlu0.b32.cont [5/16] %v1484, 128
      %1517 = vxpose.xlu0.b32.cont [6/16] %v1485, 128
      %1518 = vxpose.xlu0.b32.cont [7/16] %v1486, 128
      %1519 = vxpose.xlu0.b32.cont [8/16] %v1487, 128
      %1520 = vxpose.xlu0.b32.cont [9/16] %v1488, 128
      %1521 = vxpose.xlu0.b32.cont [10/16] %v1489, 128
      %1522 = vxpose.xlu0.b32.cont [11/16] %v1490, 128
      %1523 = vxpose.xlu0.b32.cont [12/16] %v1491, 128
      %1524 = vxpose.xlu0.b32.cont [13/16] %v1492, 128
      %1525 = vxpose.xlu0.b32.cont [14/16] %v1493, 128
      %1526 = vxpose.xlu0.b32.cont [15/16] %v1494, 128
      %1527 = vxpose.xlu0.b32.end [16/16] %v1495, 128
      %v1528 = vpop.trf.xlu0
      %v1529 = vpop.trf.xlu0
      %v1530 = vpop.trf.xlu0
      %v1531 = vpop.trf.xlu0
      %v1532 = vpop.trf.xlu0
      %v1533 = vpop.trf.xlu0
      %v1534 = vpop.trf.xlu0
      %v1535 = vpop.trf.xlu0
      %v1536 = vpop.trf.xlu0
      %v1537 = vpop.trf.xlu0
      %v1538 = vpop.trf.xlu0
      %v1539 = vpop.trf.xlu0
      %v1540 = vpop.trf.xlu0
      %v1541 = vpop.trf.xlu0
      %v1542 = vpop.trf.xlu0
      %v1543 = vpop.trf.xlu0
      %1544 = vxpose.xlu0.b32.start [1/16] %v1496, 128
      %1545 = vxpose.xlu0.b32.cont [2/16] %v1497, 128
      %1546 = vxpose.xlu0.b32.cont [3/16] %v1498, 128
      %1547 = vxpose.xlu0.b32.cont [4/16] %v1499, 128
      %1548 = vxpose.xlu0.b32.cont [5/16] %v1500, 128
      %1549 = vxpose.xlu0.b32.cont [6/16] %v1501, 128
      %1550 = vxpose.xlu0.b32.cont [7/16] %v1502, 128
      %1551 = vxpose.xlu0.b32.cont [8/16] %v1503, 128
      %1552 = vxpose.xlu0.b32.cont [9/16] %v1504, 128
      %1553 = vxpose.xlu0.b32.cont [10/16] %v1505, 128
      %1554 = vxpose.xlu0.b32.cont [11/16] %v1506, 128
      %1555 = vxpose.xlu0.b32.cont [12/16] %v1507, 128
      %1556 = vxpose.xlu0.b32.cont [13/16] %v1508, 128
      %1557 = vxpose.xlu0.b32.cont [14/16] %v1509, 128
      %1558 = vxpose.xlu0.b32.cont [15/16] %v1510, 128
      %1559 = vxpose.xlu0.b32.end [16/16] %v1511, 128
      %v1560 = vpop.trf.xlu0
      %v1561 = vpop.trf.xlu0
      %v1562 = vpop.trf.xlu0
      %v1563 = vpop.trf.xlu0
      %v1564 = vpop.trf.xlu0
      %v1565 = vpop.trf.xlu0
      %v1566 = vpop.trf.xlu0
      %v1567 = vpop.trf.xlu0
      %v1568 = vpop.trf.xlu0
      %v1569 = vpop.trf.xlu0
      %v1570 = vpop.trf.xlu0
      %v1571 = vpop.trf.xlu0
      %v1572 = vpop.trf.xlu0
      %v1573 = vpop.trf.xlu0
      %v1574 = vpop.trf.xlu0
      %v1575 = vpop.trf.xlu0
      %1576 = vst [vmem:[%s386] sm:$0xff] %v1528
      %1577 = vst [vmem:[%s386 + $0x8] sm:$0xff] %v1560
      %1578 = vst [vmem:[%s386 + $0x10] sm:$0xff] %v1529
      %1579 = vst [vmem:[%s386 + $0x18] sm:$0xff] %v1561
      %1580 = vst [vmem:[%s386 + $0x20] sm:$0xff] %v1530
      %1581 = vst [vmem:[%s386 + $0x28] sm:$0xff] %v1562
      %1582 = vst [vmem:[%s386 + $0x30] sm:$0xff] %v1531
      %1583 = vst [vmem:[%s386 + $0x38] sm:$0xff] %v1563
      %s1584 = smul.u32 2, %s23
      %p1585 = scmp.lt.s32.totalorder %s22, 1
      %s1586 = scalar_select %p1585, %s22, 1
      %p1587 = scmp.lt.s32.totalorder %s1584, 1
      %s1588 = scalar_select %p1587, %s1584, 1
      %s1589 = smul.addr %s1586, 8
      %s1590 = sadd.s32 %s1588, %s1589
      %s1591 = smul.addr %s1590, 8
      %s1592 = scalar_lea.vmem %s4, %s1591
      %p1593 = scmp.lt.s32.totalorder %s22, 1
      %s1594 = scalar_select %p1593, %s22, 1
      %p1595 = scmp.lt.s32.totalorder %s23, 0
      %s1596 = scalar_select %p1595, %s23, 0
      %s1597 = sadd.s32 %s1596, %s1594
      %s1598 = scalar_lea.vmem %s5, %s1597
      %p1599 = scmp.lt.s32.totalorder %s22, 1
      %s1600 = scalar_select %p1599, %s22, 1
      %p1601 = scmp.lt.s32.totalorder %s23, 0
      %s1602 = scalar_select %p1601, %s23, 0
      %s1603 = sadd.s32 %s1602, %s1600
      %s1604 = scalar_lea.vmem %s6, %s1603
      // Predicated region
      $region37: #{upsampler_block_forward.2} parent=35 // pred_check
        %p1605 = pneg %p152
      $region38: #{upsampler_block_forward.2} parent=35 // pred_check_branch
        %1607 = sbr.rel (%p1605) target = $region40
      $region39: #{upsampler_block_forward.2} parent=35 // pred_region
        %s1608 = smul.u32 2, %s23
      $region40: #{upsampler_block_forward.2} parent=35 // pred_fallthru
        _
      // Predicated region
      $region41: #{upsampler_block_forward.2} parent=35 // pred_check
        %p1609 = pneg %p180
      $region42: #{upsampler_block_forward.2} parent=35 // pred_check_branch
        %1611 = sbr.rel (%p1609) target = $region44
      $region43: #{upsampler_block_forward.2} parent=35 // pred_region
        _
      $region44: #{upsampler_block_forward.2} parent=35 // pred_fallthru
        _
      // Predicated region
      $region45: #{upsampler_block_forward.2} parent=35 // pred_check
        %p1612 = pneg %p208
      $region46: #{upsampler_block_forward.2} parent=35 // pred_check_branch
        %1614 = sbr.rel (%p1612) target = $region48
      $region47: #{upsampler_block_forward.2} parent=35 // pred_region
        _
      $region48: #{upsampler_block_forward.2} parent=35 // pred_fallthru
        _
    $region36: #{upsampler_block_forward.2} parent=5 // pred_fallthru
      _
    %p1615 = scmp.le.s32.totalorder 2, %s13
    // Predicated region
    $region49: #{upsampler_block_forward.2} parent=5 // pred_check
      %p1616 = pneg %p1615
    $region50: #{upsampler_block_forward.2} parent=5 // pred_check_branch
      %1618 = sbr.rel (%p1616) target = $region52
    $region51: #{upsampler_block_forward.2} parent=5 // pred_region
      %s1619 = ssub.s32 %s13, 2
      // Predicated region
      $region53: #{upsampler_block_forward.2} parent=51 // pred_check
        %p1620 = pneg %p158
      $region54: #{upsampler_block_forward.2} parent=51 // pred_check_branch
        %1622 = sbr.rel (%p1620) target = $region56
      $region55: #{upsampler_block_forward.2} parent=51 // pred_region
        %s1623 = smul.u32 2, %s25
        %p1624 = scmp.lt.s32.totalorder %s24, 1
        %s1625 = scalar_select %p1624, %s24, 1
        %p1626 = scmp.lt.s32.totalorder %s1623, 1
        %s1627 = scalar_select %p1626, %s1623, 1
        %s1628 = smul.addr %s1625, 8
        %s1629 = sadd.s32 %s1627, %s1628
        %s1630 = smul.addr %s1629, 8
        %s1631 = scalar_lea.vmem %s4, %s1630
      $region56: #{upsampler_block_forward.2} parent=51 // pred_fallthru
        _
      // Predicated region
      $region57: #{upsampler_block_forward.2} parent=51 // pred_check
        %p1632 = pneg %p186
      $region58: #{upsampler_block_forward.2} parent=51 // pred_check_branch
        %1634 = sbr.rel (%p1632) target = $region60
      $region59: #{upsampler_block_forward.2} parent=51 // pred_region
        %p1635 = scmp.lt.s32.totalorder %s24, 1
        %s1636 = scalar_select %p1635, %s24, 1
        %p1637 = scmp.lt.s32.totalorder %s25, 0
        %s1638 = scalar_select %p1637, %s25, 0
        %s1639 = sadd.s32 %s1638, %s1636
        %s1640 = scalar_lea.vmem %s5, %s1639
      $region60: #{upsampler_block_forward.2} parent=51 // pred_fallthru
        _
      // Predicated region
      $region61: #{upsampler_block_forward.2} parent=51 // pred_check
        %p1641 = pneg %p214
      $region62: #{upsampler_block_forward.2} parent=51 // pred_check_branch
        %1643 = sbr.rel (%p1641) target = $region64
      $region63: #{upsampler_block_forward.2} parent=51 // pred_region
        %p1644 = scmp.lt.s32.totalorder %s24, 1
        %s1645 = scalar_select %p1644, %s24, 1
        %p1646 = scmp.lt.s32.totalorder %s25, 0
        %s1647 = scalar_select %p1646, %s25, 0
        %s1648 = sadd.s32 %s1647, %s1645
        %s1649 = scalar_lea.vmem %s6, %s1648
      $region64: #{upsampler_block_forward.2} parent=51 // pred_fallthru
        _
    $region52: #{upsampler_block_forward.2} parent=5 // pred_fallthru
      _
  $region6: #{upsampler_block_forward.2} parent=0 // loop_footer
    %s17 = sadd.s32 1, %s13
  $region7: #{upsampler_block_forward.2} parent=0 // loop_footer_branch
    %12 = sbr.rel target = $region3
  $region8: #{upsampler_block_forward.2} parent=0 // loop_exit
    _

</llo_original>
